<compile_context>
chip_gen: v7x
topology: tpu7x:2x2x1
jax: 0.10.0
libtpu: 0.0.40
codegen_flags: <defaults>
</compile_context>

<pallas_src>
import functools

import jax
import jax.numpy as jnp
from jax.experimental import pallas as pl
from jax.experimental.pallas import tpu as pltpu


def _round_up(x, m):
    return ((x + m - 1) // m) * m


def _lc_attention_kernel(xf_ref, xl_ref, wq_ref, wkv_ref, wout_ref, bout_ref,
                         seg_ref, segt_ref, o_ref, *,
                         n_pad, n_valid, heads, inner_pad, seg_precision):
    rows, dim = xf_ref.shape            # rows = btile * n_pad (sublane aligned)
    bt = rows // n_pad

    x2 = xf_ref[...]                                                      # (rows, dim)

    # Fused K/V projection: one MXU pass over the whole x stream.
    kv = jnp.dot(x2, wkv_ref[...], preferred_element_type=jnp.float32)    # (rows, 2*inner_pad)
    # Both halves start on 128-lane boundaries (inner_pad % 128 == 0) -> no relayout.
    k3 = kv[:, :inner_pad].reshape(bt, n_pad, inner_pad)                  # (bt, n_pad, inner_pad)
    v = kv[:, inner_pad:]                                                 # (rows, inner_pad)

    # Q only from the pre-gathered last-token rows; softmax scale folded into Wq.
    q = jnp.dot(xl_ref[...], wq_ref[...], preferred_element_type=jnp.float32)  # (bt, inner_pad)

    # Per-head logits: VPU broadcast-multiply, then lane-segment sums through a
    # constant 0/1 (inner_pad, heads) matrix (no transposes, no per-head loops).
    qk = k3 * q[:, None, :]                                               # (bt, n_pad, inner_pad)
    scores = jnp.dot(qk.reshape(rows, inner_pad), seg_ref[...],
                     preferred_element_type=jnp.float32,
                     precision=seg_precision)                             # (rows, heads)
    scores = scores.reshape(bt, n_pad, heads)

    if n_valid < n_pad:
        # Mask padded sequence positions out of the softmax.
        pos = jax.lax.broadcasted_iota(jnp.int32, (n_pad, heads), 0)
        scores = jnp.where((pos < n_valid)[None], scores, -1e30)

    # Softmax over the sequence (sublane) axis per (batch row, head).
    m = jnp.max(scores, axis=1, keepdims=True)                            # (bt, 1, heads)
    p = jnp.exp(scores - m)
    denom = jnp.sum(p, axis=1, keepdims=True)
    inv = pl.reciprocal(denom, approx=True)                               # EUP seed
    inv = inv * (2.0 - denom * inv)                                       # Newton step -> f32 accurate
    p = p * inv                                                           # (bt, n_pad, heads)

    # Expand head weights back onto their dim_head lanes, weight V, reduce over seq.
    pe = jnp.dot(p.reshape(rows, heads), segt_ref[...],
                 preferred_element_type=jnp.float32,
                 precision=seg_precision)                                 # (rows, inner_pad)
    ctx = jnp.sum((pe * v).reshape(bt, n_pad, inner_pad), axis=1)         # (bt, inner_pad)

    # Output projection + bias (f32 weights, lane-dense padded to dim_pad).
    res = jnp.dot(ctx, wout_ref[...], preferred_element_type=jnp.float32)
    o_ref[...] = (res + bout_ref[...]).astype(o_ref.dtype)


def prepare_lc_attention_weights(w_qkv, w_out, b_out, *, heads, dim_head,
                                 mxu_dtype=jnp.bfloat16):
    """One-time weight repacking (hoisted out of the per-call hot path).

    w_qkv: (3*inner, dim) PyTorch Linear layout, rows ordered [q; k; v].
    w_out: (dim, inner).  b_out: (dim,).
    mxu_dtype: streaming dtype for x / Wq / Wkv (default bf16: kernel is
      HBM-bandwidth bound; accumulation stays f32). Pass None for pure f32.
    """
    inner = heads * dim_head
    dim = w_qkv.shape[1]
    inner_pad = _round_up(inner, 128)
    dim_pad = _round_up(dim, 128)
    scale = dim_head ** -0.5
    stream_dtype = jnp.float32 if mxu_dtype is None else mxu_dtype

    def pad_cols(w, cols):
        return jnp.pad(w, ((0, 0), (0, cols - w.shape[1])))

    wq = pad_cols(jnp.transpose(w_qkv[:inner]).astype(jnp.float32) * scale, inner_pad)
    wk = pad_cols(jnp.transpose(w_qkv[inner:2 * inner]), inner_pad)
    wv = pad_cols(jnp.transpose(w_qkv[2 * inner:]), inner_pad)
    wkv = jnp.concatenate([wk, wv], axis=1)                   # (dim, 2*inner_pad), 128-aligned halves
    wout = jnp.pad(jnp.transpose(w_out),
                   ((0, inner_pad - inner), (0, dim_pad - dim))).astype(jnp.float32)
    bout = jnp.pad(jnp.reshape(b_out, (1, dim)),
                   ((0, 0), (0, dim_pad - dim))).astype(jnp.float32)

    # 0/1 segment matrix: real lane i belongs to head i // dim_head; padded lanes -> no head.
    lane = jnp.arange(inner_pad)
    seg = ((lane[:, None] // dim_head == jnp.arange(heads)[None, :])
           & (lane[:, None] < inner)).astype(jnp.float32)     # (inner_pad, heads)
    segt = jnp.transpose(seg)                                 # (heads, inner_pad)

    return dict(wq=wq.astype(stream_dtype), wkv=wkv.astype(stream_dtype),
                wout=wout, bout=bout, seg=seg, segt=segt,
                heads=heads, dim_head=dim_head, dim=dim, dim_pad=dim_pad,
                inner=inner, inner_pad=inner_pad, stream_dtype=stream_dtype)


def _vmem_limit_bytes():
    """Generation-aware scoped VMEM limit: ~75% of physical, capped at 100 MiB
    (v5e/v6e 128 MiB -> 96 MiB; v7x 64 MiB -> 48 MiB)."""
    cap = 64 * 1024 * 1024
    try:
        cap = int(getattr(pltpu.get_tpu_info(), "vmem_capacity_bytes", cap))
    except Exception:
        pass
    return min(100 * 1024 * 1024, (cap * 3) // 4)


def _pick_btile(b, n_pad, max_rows):
    """Largest batch tile with btile*n_pad <= max_rows, btile | b, an (8,128)-friendly
    output block, preferring >= 2 grid steps (megacore on v7x, overlap elsewhere)."""
    cap = max(1, max_rows // n_pad)
    best = None
    for bt in range(min(cap, b), 0, -1):
        if b % bt:
            continue
        if bt % 8 and bt != b:
            continue
        if best is None:
            best = bt
        if b // bt >= 2:
            return bt
    if best is not None:
        return best
    # No aligned divisor fits the budget: take the largest divisor that does
    # (partial-sublane output stores are masked but correct).
    for bt in range(min(cap, b), 0, -1):
        if b % bt == 0:
            return bt
    return 1


def lc_attention_prepared(x, prepared, *, btile=None, x_buffers=2):
    """x: (b, n, dim). `prepared` from prepare_lc_attention_weights. Returns (b, 1, dim)."""
    b, n, dim = x.shape
    assert dim == prepared["dim"], (dim, prepared["dim"])
    heads, inner_pad = prepared["heads"], prepared["inner_pad"]
    dim_pad, stream_dtype = prepared["dim_pad"], prepared["stream_dtype"]
    out_dtype = x.dtype

    # Sequence padded to a sublane multiple so every in-kernel (rows,*) <-> (bt,n_pad,*)
    # reshape is a pure retile (no relayout copies); padded keys are masked out.
    n_pad = _round_up(n, 8)
    xs = x.astype(stream_dtype)
    x_last = xs[:, n - 1, :]                                   # (b, dim): pre-gathered last token
    if n_pad != n:
        xs = jnp.pad(xs, ((0, 0), (0, n_pad - n), (0, 0)))
    x_flat = xs.reshape(b * n_pad, dim)

    vmem_limit = _vmem_limit_bytes()
    if btile is None:
        weight_bytes = sum(int(prepared[k].size) * prepared[k].dtype.itemsize
                           for k in ("wq", "wkv", "wout", "bout", "seg", "segt"))
        per_row = (x_buffers * dim * jnp.dtype(stream_dtype).itemsize
                   + 7 * inner_pad * 4)                        # x stream + live f32 intermediates
        budget = max(int(0.6 * vmem_limit) - 2 * weight_bytes, vmem_limit // 8)
        btile = _pick_btile(b, n_pad, max(n_pad, budget // per_row))
    assert b % btile == 0, (b, btile)
    grid = (b // btile,)

    def build(weight_mode, x_mode, seg_precision):
        def pm(mode):
            return {} if mode is None else {"pipeline_mode": mode}
        kernel = functools.partial(
            _lc_attention_kernel, n_pad=n_pad, n_valid=n, heads=heads,
            inner_pad=inner_pad, seg_precision=seg_precision)
        return pl.pallas_call(
            kernel,
            out_shape=jax.ShapeDtypeStruct((b, dim_pad), out_dtype),
            grid=grid,
            in_specs=[
                pl.BlockSpec((btile * n_pad, dim), lambda i: (i, 0), **pm(x_mode)),
                pl.BlockSpec((btile, dim), lambda i: (i, 0)),
                pl.BlockSpec((dim, inner_pad), lambda i: (0, 0), **pm(weight_mode)),
                pl.BlockSpec((dim, 2 * inner_pad), lambda i: (0, 0), **pm(weight_mode)),
                pl.BlockSpec((inner_pad, dim_pad), lambda i: (0, 0), **pm(weight_mode)),
                pl.BlockSpec((1, dim_pad), lambda i: (0, 0), **pm(weight_mode)),
                pl.BlockSpec((inner_pad, heads), lambda i: (0, 0), **pm(weight_mode)),
                pl.BlockSpec((heads, inner_pad), lambda i: (0, 0), **pm(weight_mode)),
            ],
            out_specs=pl.BlockSpec((btile, dim_pad), lambda i: (i, 0)),
            compiler_params=pltpu.CompilerParams(
                dimension_semantics=("parallel",),
                vmem_limit_bytes=vmem_limit),
        )(x_flat, x_last, prepared["wq"], prepared["wkv"], prepared["wout"],
          prepared["bout"], prepared["seg"], prepared["segt"])

    # Weight tiles are grid-resident -> single-buffer them; run the tiny 0/1 head
    # reduction matmuls at HIGHEST precision. If this JAX/libtpu build rejects either
    # knob, rebuild with the plain (still correct, previously validated) config.
    x_mode = pl.Buffered(x_buffers) if x_buffers != 2 else None   # sweep Buffered(3) on v7x
    try:
        out2d = build(pl.Buffered(1), x_mode, jax.lax.Precision.HIGHEST)
    except Exception:
        out2d = build(None, None, None)

    # Kernel stores a lane-dense (b, dim_pad) slab; strip padding, restore (b, 1, dim).
    return out2d[:, :dim].reshape(b, 1, dim)


def lc_attention(x, w_qkv, w_out, b_out, *, heads, dim_head, btile=None,
                 mxu_dtype=jnp.bfloat16, x_buffers=2):
    """Convenience wrapper: repack weights then run the kernel.
    Note: mirrors the project_out=True branch of the module (Linear + bias; dropout
    is identity in eval). For project_out=False pass identity weights / zero bias."""
    prepared = prepare_lc_attention_weights(
        w_qkv, w_out, b_out, heads=heads, dim_head=dim_head, mxu_dtype=mxu_dtype)
    return lc_attention_prepared(x, prepared, btile=btile, x_buffers=x_buffers)


def lc_attention_reference(x, w_qkv, w_out, b_out, *, heads, dim_head):
    """Pure-JAX transcription of the PyTorch forward (eval mode)."""
    b, n, dim = x.shape
    inner = heads * dim_head
    qkv = x @ w_qkv.T                                             # (b, n, 3*inner)
    q, k, v = jnp.split(qkv, 3, axis=-1)

    def to_heads(t):
        return t.reshape(b, n, heads, dim_head).transpose(0, 2, 1, 3)

    q, k, v = to_heads(q), to_heads(k), to_heads(v)
    q = q[:, :, -1:, :]                                           # (b, h, 1, d)
    dots = jnp.einsum('bhid,bhjd->bhij', q, k) * (dim_head ** -0.5)
    attn = jax.nn.softmax(dots, axis=-1)
    out = jnp.einsum('bhij,bhjd->bhid', attn, v)
    out = out.transpose(0, 2, 1, 3).reshape(b, 1, inner)
    return out @ w_out.T + b_out


if __name__ == "__main__":
    # Small shapes consistent with the module.
    B, N, DIM = 2, 8, 32
    HEADS, DIM_HEAD = 4, 8
    INNER = HEADS * DIM_HEAD

    key = jax.random.PRNGKey(0)
    kx, kqkv, kwo, kbo = jax.random.split(key, 4)

    x = jax.random.normal(kx, (B, N, DIM), dtype=jnp.float32)
    # Deterministic init mimicking PyTorch Linear defaults (uniform +-1/sqrt(fan_in)).
    w_qkv = jax.random.uniform(kqkv, (3 * INNER, DIM), dtype=jnp.float32,
                               minval=-DIM ** -0.5, maxval=DIM ** -0.5)
    w_out = jax.random.uniform(kwo, (DIM, INNER), dtype=jnp.float32,
                               minval=-INNER ** -0.5, maxval=INNER ** -0.5)
    b_out = jax.random.uniform(kbo, (DIM,), dtype=jnp.float32,
                               minval=-INNER ** -0.5, maxval=INNER ** -0.5)

    ref = lc_attention_reference(x, w_qkv, w_out, b_out, heads=HEADS, dim_head=DIM_HEAD)

    # 1) f32 streaming path: tight parity with the XLA reference.
    prep32 = prepare_lc_attention_weights(w_qkv, w_out, b_out, heads=HEADS,
                                          dim_head=DIM_HEAD, mxu_dtype=None)
    out32 = jax.block_until_ready(lc_attention_prepared(x, prep32))
    assert out32.shape == (B, 1, DIM)
    assert jnp.allclose(out32, ref, atol=2e-3, rtol=2e-3), "f32 path mismatch vs reference"

    # 2) Default bf16-streaming path (production config; f32 accumulation).
    prep16 = prepare_lc_attention_weights(w_qkv, w_out, b_out, heads=HEADS, dim_head=DIM_HEAD)
    out16 = jax.block_until_ready(lc_attention_prepared(x, prep16))
    assert out16.shape == (B, 1, DIM)
    assert jnp.allclose(out16, ref, atol=5e-2, rtol=5e-2), "bf16 path mismatch vs reference"

    # 3) Non-sublane-aligned sequence length: exercises the padded / masked softmax path.
    N2 = 11
    x2 = jax.random.normal(jax.random.PRNGKey(1), (B, N2, DIM), dtype=jnp.float32)
    ref2 = lc_attention_reference(x2, w_qkv, w_out, b_out, heads=HEADS, dim_head=DIM_HEAD)
    out2 = jax.block_until_ready(lc_attention_prepared(x2, prep32))
    assert jnp.allclose(out2, ref2, atol=2e-3, rtol=2e-3), "masked path mismatch vs reference"

    print("KERNEL_OK")
</pallas_src>

<mosaic_0001>
module attributes {stable_mosaic.version = 11 : i64} {
  func.func @_lc_attention_kernel(%arg0: i32, %arg1: memref<16x32xf32, #tpu.memory_space<vmem>>, %arg2: memref<2x32xf32, #tpu.memory_space<vmem>>, %arg3: memref<32x128xf32, #tpu.memory_space<vmem>>, %arg4: memref<32x256xf32, #tpu.memory_space<vmem>>, %arg5: memref<128x128xf32, #tpu.memory_space<vmem>>, %arg6: memref<1x128xf32, #tpu.memory_space<vmem>>, %arg7: memref<128x4xf32, #tpu.memory_space<vmem>>, %arg8: memref<4x128xf32, #tpu.memory_space<vmem>>, %arg9: memref<2x128xf32, #tpu.memory_space<vmem>>) attributes {dimension_semantics = [#tpu.dimension_semantics<parallel>], iteration_bounds = array<i64: 1>, scalar_prefetch = 0 : i64, scratch_operands = 0 : i64, tpu.core_type = #tpu.core_type<tc>, window_params = [{transform_indices = @transform_0, window_bounds = array<i64: 16, 32>}, {transform_indices = @transform_1, window_bounds = array<i64: 2, 32>}, {pipeline_mode = #tpu.pipeline_mode<synchronous>, transform_indices = @transform_2, window_bounds = array<i64: 32, 128>}, {pipeline_mode = #tpu.pipeline_mode<synchronous>, transform_indices = @transform_3, window_bounds = array<i64: 32, 256>}, {pipeline_mode = #tpu.pipeline_mode<synchronous>, transform_indices = @transform_4, window_bounds = array<i64: 128, 128>}, {pipeline_mode = #tpu.pipeline_mode<synchronous>, transform_indices = @transform_5, window_bounds = array<i64: 1, 128>}, {pipeline_mode = #tpu.pipeline_mode<synchronous>, transform_indices = @transform_6, window_bounds = array<i64: 128, 4>}, {pipeline_mode = #tpu.pipeline_mode<synchronous>, transform_indices = @transform_7, window_bounds = array<i64: 4, 128>}, {transform_indices = @transform_8, window_bounds = array<i64: 2, 128>}]} {
    %c0 = arith.constant 0 : index
    %c0_0 = arith.constant 0 : index
    %0 = vector.load %arg1[%c0, %c0_0] : memref<16x32xf32, #tpu.memory_space<vmem>>, vector<16x32xf32>
    %c0_1 = arith.constant 0 : index
    %c0_2 = arith.constant 0 : index
    %1 = vector.load %arg4[%c0_1, %c0_2] : memref<32x256xf32, #tpu.memory_space<vmem>>, vector<32x256xf32>
    %cst = arith.constant dense<0.000000e+00> : vector<16x256xf32>
    %2 = tpu.matmul %0, %1, %cst {dimension_numbers = #tpu.dot_dimension_numbers<[1], [0], [0], [1], [0, 0, 1, 1], [], []>} : vector<16x32xf32>, vector<32x256xf32>, vector<16x256xf32> -> vector<16x256xf32>
    %3 = vector.extract_strided_slice %2 {offsets = [0, 0], sizes = [16, 128], strides = [1, 1]} : vector<16x256xf32> to vector<16x128xf32>
    %4 = vector.shape_cast %3 : vector<16x128xf32> to vector<2x8x128xf32>
    %5 = vector.extract_strided_slice %2 {offsets = [0, 128], sizes = [16, 128], strides = [1, 1]} : vector<16x256xf32> to vector<16x128xf32>
    %c0_3 = arith.constant 0 : index
    %c0_4 = arith.constant 0 : index
    %6 = vector.load %arg2[%c0_3, %c0_4] : memref<2x32xf32, #tpu.memory_space<vmem>>, vector<2x32xf32>
    %c0_5 = arith.constant 0 : index
    %c0_6 = arith.constant 0 : index
    %7 = vector.load %arg3[%c0_5, %c0_6] : memref<32x128xf32, #tpu.memory_space<vmem>>, vector<32x128xf32>
    %cst_7 = arith.constant dense<0.000000e+00> : vector<2x128xf32>
    %8 = tpu.matmul %6, %7, %cst_7 {dimension_numbers = #tpu.dot_dimension_numbers<[1], [0], [0], [1], [0, 0, 1, 1], [], []>} : vector<2x32xf32>, vector<32x128xf32>, vector<2x128xf32> -> vector<2x128xf32>
    %9 = vector.shape_cast %8 : vector<2x128xf32> to vector<2x1x128xf32>
    %10 = vector.broadcast %9 : vector<2x1x128xf32> to vector<2x8x128xf32>
    %11 = arith.mulf %4, %10 : vector<2x8x128xf32>
    %12 = vector.shape_cast %11 : vector<2x8x128xf32> to vector<16x128xf32>
    %c0_8 = arith.constant 0 : index
    %c0_9 = arith.constant 0 : index
    %13 = vector.load %arg7[%c0_8, %c0_9] : memref<128x4xf32, #tpu.memory_space<vmem>>, vector<128x4xf32>
    %cst_10 = arith.constant dense<0.000000e+00> : vector<16x4xf32>
    %14 = tpu.matmul %12, %13, %cst_10 {dimension_numbers = #tpu.dot_dimension_numbers<[1], [0], [0], [1], [0, 0, 1, 1], [], []>, precision = #tpu.contract_precision<fp32>} : vector<16x128xf32>, vector<128x4xf32>, vector<16x4xf32> -> vector<16x4xf32>
    %15 = vector.shape_cast %14 : vector<16x4xf32> to vector<2x8x4xf32>
    %cst_11 = arith.constant dense<0xFF800000> : vector<2x4xf32>
    %16 = vector.multi_reduction <maximumf>, %15, %cst_11 [1] : vector<2x8x4xf32> to vector<2x4xf32>
    %17 = vector.shape_cast %16 : vector<2x4xf32> to vector<2x1x4xf32>
    %18 = vector.broadcast %17 : vector<2x1x4xf32> to vector<2x8x4xf32>
    %19 = arith.subf %15, %18 : vector<2x8x4xf32>
    %20 = math.exp %19 : vector<2x8x4xf32>
    %cst_12 = arith.constant dense<0.000000e+00> : vector<2x4xf32>
    %21 = vector.multi_reduction <add>, %20, %cst_12 [1] : vector<2x8x4xf32> to vector<2x4xf32>
    %22 = vector.shape_cast %21 : vector<2x4xf32> to vector<2x1x4xf32>
    %23 = tpu.reciprocal %22 {approx = true} : vector<2x1x4xf32> -> vector<2x1x4xf32>
    %24 = arith.mulf %22, %23 : vector<2x1x4xf32>
    %cst_13 = arith.constant 2.000000e+00 : f32
    %25 = vector.broadcast %cst_13 : f32 to vector<2x1x4xf32>
    %26 = arith.subf %25, %24 : vector<2x1x4xf32>
    %27 = arith.mulf %23, %26 : vector<2x1x4xf32>
    %28 = vector.broadcast %27 : vector<2x1x4xf32> to vector<2x8x4xf32>
    %29 = arith.mulf %20, %28 : vector<2x8x4xf32>
    %30 = vector.shape_cast %29 : vector<2x8x4xf32> to vector<16x4xf32>
    %c0_14 = arith.constant 0 : index
    %c0_15 = arith.constant 0 : index
    %31 = vector.load %arg8[%c0_14, %c0_15] : memref<4x128xf32, #tpu.memory_space<vmem>>, vector<4x128xf32>
    %cst_16 = arith.constant dense<0.000000e+00> : vector<16x128xf32>
    %32 = tpu.matmul %30, %31, %cst_16 {dimension_numbers = #tpu.dot_dimension_numbers<[1], [0], [0], [1], [0, 0, 1, 1], [], []>, precision = #tpu.contract_precision<fp32>} : vector<16x4xf32>, vector<4x128xf32>, vector<16x128xf32> -> vector<16x128xf32>
    %33 = arith.mulf %32, %5 : vector<16x128xf32>
    %34 = vector.shape_cast %33 : vector<16x128xf32> to vector<2x8x128xf32>
    %cst_17 = arith.constant dense<0.000000e+00> : vector<2x128xf32>
    %35 = vector.multi_reduction <add>, %34, %cst_17 [1] : vector<2x8x128xf32> to vector<2x128xf32>
    %c0_18 = arith.constant 0 : index
    %c0_19 = arith.constant 0 : index
    %36 = vector.load %arg5[%c0_18, %c0_19] : memref<128x128xf32, #tpu.memory_space<vmem>>, vector<128x128xf32>
    %cst_20 = arith.constant dense<0.000000e+00> : vector<2x128xf32>
    %37 = tpu.matmul %35, %36, %cst_20 {dimension_numbers = #tpu.dot_dimension_numbers<[1], [0], [0], [1], [0, 0, 1, 1], [], []>} : vector<2x128xf32>, vector<128x128xf32>, vector<2x128xf32> -> vector<2x128xf32>
    %c0_21 = arith.constant 0 : index
    %c0_22 = arith.constant 0 : index
    %38 = vector.load %arg6[%c0_21, %c0_22] : memref<1x128xf32, #tpu.memory_space<vmem>>, vector<1x128xf32>
    %39 = vector.broadcast %38 : vector<1x128xf32> to vector<2x128xf32>
    %40 = arith.addf %37, %39 : vector<2x128xf32>
    %c0_23 = arith.constant 0 : index
    %c0_24 = arith.constant 0 : index
    %41 = vector.load %arg9[%c0_23, %c0_24] : memref<2x128xf32, #tpu.memory_space<vmem>>, vector<2x128xf32>
    tpu.vector_store %arg9[%c0_23, %c0_24], %40 {strides = array<i32>} : memref<2x128xf32, #tpu.memory_space<vmem>>, vector<2x128xf32>,
    return
  }
  func.func @transform_0(%arg0: i32) -> (i32, i32) {
    %c0_i32 = arith.constant 0 : i32
    %c0_i32_0 = arith.constant 0 : i32
    return %arg0, %c0_i32 : i32, i32
  }
  func.func @transform_1(%arg0: i32) -> (i32, i32) {
    %c0_i32 = arith.constant 0 : i32
    %c0_i32_0 = arith.constant 0 : i32
    return %arg0, %c0_i32 : i32, i32
  }
  func.func @transform_2(%arg0: i32) -> (i32, i32) {
    %c0_i32 = arith.constant 0 : i32
    %c0_i32_0 = arith.constant 0 : i32
    %c0_i32_1 = arith.constant 0 : i32
    return %c0_i32, %c0_i32_0 : i32, i32
  }
  func.func @transform_3(%arg0: i32) -> (i32, i32) {
    %c0_i32 = arith.constant 0 : i32
    %c0_i32_0 = arith.constant 0 : i32
    %c0_i32_1 = arith.constant 0 : i32
    return %c0_i32, %c0_i32_0 : i32, i32
  }
  func.func @transform_4(%arg0: i32) -> (i32, i32) {
    %c0_i32 = arith.constant 0 : i32
    %c0_i32_0 = arith.constant 0 : i32
    %c0_i32_1 = arith.constant 0 : i32
    return %c0_i32, %c0_i32_0 : i32, i32
  }
  func.func @transform_5(%arg0: i32) -> (i32, i32) {
    %c0_i32 = arith.constant 0 : i32
    %c0_i32_0 = arith.constant 0 : i32
    %c0_i32_1 = arith.constant 0 : i32
    return %c0_i32, %c0_i32_0 : i32, i32
  }
  func.func @transform_6(%arg0: i32) -> (i32, i32) {
    %c0_i32 = arith.constant 0 : i32
    %c0_i32_0 = arith.constant 0 : i32
    %c0_i32_1 = arith.constant 0 : i32
    return %c0_i32, %c0_i32_0 : i32, i32
  }
  func.func @transform_7(%arg0: i32) -> (i32, i32) {
    %c0_i32 = arith.constant 0 : i32
    %c0_i32_0 = arith.constant 0 : i32
    %c0_i32_1 = arith.constant 0 : i32
    return %c0_i32, %c0_i32_0 : i32, i32
  }
  func.func @transform_8(%arg0: i32) -> (i32, i32) {
    %c0_i32 = arith.constant 0 : i32
    %c0_i32_0 = arith.constant 0 : i32
    return %arg0, %c0_i32 : i32, i32
  }
}

module attributes {stable_mosaic.version = 11 : i64} {
  func.func @_lc_attention_kernel(%arg0: i32, %arg1: memref<16x32xf32, #tpu.memory_space<vmem>>, %arg2: memref<2x32xf32, #tpu.memory_space<vmem>>, %arg3: memref<32x128xf32, #tpu.memory_space<vmem>>, %arg4: memref<32x256xf32, #tpu.memory_space<vmem>>, %arg5: memref<128x128xf32, #tpu.memory_space<vmem>>, %arg6: memref<1x128xf32, #tpu.memory_space<vmem>>, %arg7: memref<128x4xf32, #tpu.memory_space<vmem>>, %arg8: memref<4x128xf32, #tpu.memory_space<vmem>>, %arg9: memref<2x128xf32, #tpu.memory_space<vmem>>) attributes {dimension_semantics = [#tpu.dimension_semantics<parallel>], iteration_bounds = array<i64: 1>, scalar_prefetch = 0 : i64, scratch_operands = 0 : i64, tpu.core_type = #tpu.core_type<tc>, window_params = [{transform_indices = @transform_0, window_bounds = array<i64: 16, 32>}, {transform_indices = @transform_1, window_bounds = array<i64: 2, 32>}, {pipeline_mode = #tpu.pipeline_mode<synchronous>, transform_indices = @transform_2, window_bounds = array<i64: 32, 128>}, {pipeline_mode = #tpu.pipeline_mode<synchronous>, transform_indices = @transform_3, window_bounds = array<i64: 32, 256>}, {pipeline_mode = #tpu.pipeline_mode<synchronous>, transform_indices = @transform_4, window_bounds = array<i64: 128, 128>}, {pipeline_mode = #tpu.pipeline_mode<synchronous>, transform_indices = @transform_5, window_bounds = array<i64: 1, 128>}, {pipeline_mode = #tpu.pipeline_mode<synchronous>, transform_indices = @transform_6, window_bounds = array<i64: 128, 4>}, {pipeline_mode = #tpu.pipeline_mode<synchronous>, transform_indices = @transform_7, window_bounds = array<i64: 4, 128>}, {transform_indices = @transform_8, window_bounds = array<i64: 2, 128>}]} {
    %c0 = arith.constant 0 : index
    %c0_0 = arith.constant 0 : index
    %0 = vector.load %arg1[%c0, %c0_0] : memref<16x32xf32, #tpu.memory_space<vmem>>, vector<16x32xf32>
    %c0_1 = arith.constant 0 : index
    %c0_2 = arith.constant 0 : index
    %1 = vector.load %arg4[%c0_1, %c0_2] : memref<32x256xf32, #tpu.memory_space<vmem>>, vector<32x256xf32>
    %cst = arith.constant dense<0.000000e+00> : vector<16x256xf32>
    %2 = tpu.matmul %0, %1, %cst {dimension_numbers = #tpu.dot_dimension_numbers<[1], [0], [0], [1], [0, 0, 1, 1], [], []>} : vector<16x32xf32>, vector<32x256xf32>, vector<16x256xf32> -> vector<16x256xf32>
    %3 = vector.extract_strided_slice %2 {offsets = [0, 0], sizes = [16, 128], strides = [1, 1]} : vector<16x256xf32> to vector<16x128xf32>
    %4 = vector.shape_cast %3 : vector<16x128xf32> to vector<2x8x128xf32>
    %5 = vector.extract_strided_slice %2 {offsets = [0, 128], sizes = [16, 128], strides = [1, 1]} : vector<16x256xf32> to vector<16x128xf32>
    %c0_3 = arith.constant 0 : index
    %c0_4 = arith.constant 0 : index
    %6 = vector.load %arg2[%c0_3, %c0_4] : memref<2x32xf32, #tpu.memory_space<vmem>>, vector<2x32xf32>
    %c0_5 = arith.constant 0 : index
    %c0_6 = arith.constant 0 : index
    %7 = vector.load %arg3[%c0_5, %c0_6] : memref<32x128xf32, #tpu.memory_space<vmem>>, vector<32x128xf32>
    %cst_7 = arith.constant dense<0.000000e+00> : vector<2x128xf32>
    %8 = tpu.matmul %6, %7, %cst_7 {dimension_numbers = #tpu.dot_dimension_numbers<[1], [0], [0], [1], [0, 0, 1, 1], [], []>} : vector<2x32xf32>, vector<32x128xf32>, vector<2x128xf32> -> vector<2x128xf32>
    %9 = vector.shape_cast %8 : vector<2x128xf32> to vector<2x1x128xf32>
    %10 = vector.broadcast %9 : vector<2x1x128xf32> to vector<2x8x128xf32>
    %11 = arith.mulf %4, %10 : vector<2x8x128xf32>
    %12 = vector.shape_cast %11 : vector<2x8x128xf32> to vector<16x128xf32>
    %c0_8 = arith.constant 0 : index
    %c0_9 = arith.constant 0 : index
    %13 = vector.load %arg7[%c0_8, %c0_9] : memref<128x4xf32, #tpu.memory_space<vmem>>, vector<128x4xf32>
    %cst_10 = arith.constant dense<0.000000e+00> : vector<16x4xf32>
    %14 = tpu.matmul %12, %13, %cst_10 {dimension_numbers = #tpu.dot_dimension_numbers<[1], [0], [0], [1], [0, 0, 1, 1], [], []>} : vector<16x128xf32>, vector<128x4xf32>, vector<16x4xf32> -> vector<16x4xf32>
    %15 = vector.shape_cast %14 : vector<16x4xf32> to vector<2x8x4xf32>
    %cst_11 = arith.constant dense<0xFF800000> : vector<2x4xf32>
    %16 = vector.multi_reduction <maximumf>, %15, %cst_11 [1] : vector<2x8x4xf32> to vector<2x4xf32>
    %17 = vector.shape_cast %16 : vector<2x4xf32> to vector<2x1x4xf32>
    %18 = vector.broadcast %17 : vector<2x1x4xf32> to vector<2x8x4xf32>
    %19 = arith.subf %15, %18 : vector<2x8x4xf32>
    %20 = math.exp %19 : vector<2x8x4xf32>
    %cst_12 = arith.constant dense<0.000000e+00> : vector<2x4xf32>
    %21 = vector.multi_reduction <add>, %20, %cst_12 [1] : vector<2x8x4xf32> to vector<2x4xf32>
    %22 = vector.shape_cast %21 : vector<2x4xf32> to vector<2x1x4xf32>
    %23 = tpu.reciprocal %22 {approx = true} : vector<2x1x4xf32> -> vector<2x1x4xf32>
    %24 = arith.mulf %22, %23 : vector<2x1x4xf32>
    %cst_13 = arith.constant 2.000000e+00 : f32
    %25 = vector.broadcast %cst_13 : f32 to vector<2x1x4xf32>
    %26 = arith.subf %25, %24 : vector<2x1x4xf32>
    %27 = arith.mulf %23, %26 : vector<2x1x4xf32>
    %28 = vector.broadcast %27 : vector<2x1x4xf32> to vector<2x8x4xf32>
    %29 = arith.mulf %20, %28 : vector<2x8x4xf32>
    %30 = vector.shape_cast %29 : vector<2x8x4xf32> to vector<16x4xf32>
    %c0_14 = arith.constant 0 : index
    %c0_15 = arith.constant 0 : index
    %31 = vector.load %arg8[%c0_14, %c0_15] : memref<4x128xf32, #tpu.memory_space<vmem>>, vector<4x128xf32>
    %cst_16 = arith.constant dense<0.000000e+00> : vector<16x128xf32>
    %32 = tpu.matmul %30, %31, %cst_16 {dimension_numbers = #tpu.dot_dimension_numbers<[1], [0], [0], [1], [0, 0, 1, 1], [], []>} : vector<16x4xf32>, vector<4x128xf32>, vector<16x128xf32> -> vector<16x128xf32>
    %33 = arith.mulf %32, %5 : vector<16x128xf32>
    %34 = vector.shape_cast %33 : vector<16x128xf32> to vector<2x8x128xf32>
    %cst_17 = arith.constant dense<0.000000e+00> : vector<2x128xf32>
    %35 = vector.multi_reduction <add>, %34, %cst_17 [1] : vector<2x8x128xf32> to vector<2x128xf32>
    %c0_18 = arith.constant 0 : index
    %c0_19 = arith.constant 0 : index
    %36 = vector.load %arg5[%c0_18, %c0_19] : memref<128x128xf32, #tpu.memory_space<vmem>>, vector<128x128xf32>
    %cst_20 = arith.constant dense<0.000000e+00> : vector<2x128xf32>
    %37 = tpu.matmul %35, %36, %cst_20 {dimension_numbers = #tpu.dot_dimension_numbers<[1], [0], [0], [1], [0, 0, 1, 1], [], []>} : vector<2x128xf32>, vector<128x128xf32>, vector<2x128xf32> -> vector<2x128xf32>
    %c0_21 = arith.constant 0 : index
    %c0_22 = arith.constant 0 : index
    %38 = vector.load %arg6[%c0_21, %c0_22] : memref<1x128xf32, #tpu.memory_space<vmem>>, vector<1x128xf32>
    %39 = vector.broadcast %38 : vector<1x128xf32> to vector<2x128xf32>
    %40 = arith.addf %37, %39 : vector<2x128xf32>
    %c0_23 = arith.constant 0 : index
    %c0_24 = arith.constant 0 : index
    %41 = vector.load %arg9[%c0_23, %c0_24] : memref<2x128xf32, #tpu.memory_space<vmem>>, vector<2x128xf32>
    tpu.vector_store %arg9[%c0_23, %c0_24], %40 {strides = array<i32>} : memref<2x128xf32, #tpu.memory_space<vmem>>, vector<2x128xf32>,
    return
  }
  func.func @transform_0(%arg0: i32) -> (i32, i32) {
    %c0_i32 = arith.constant 0 : i32
    %c0_i32_0 = arith.constant 0 : i32
    return %arg0, %c0_i32 : i32, i32
  }
  func.func @transform_1(%arg0: i32) -> (i32, i32) {
    %c0_i32 = arith.constant 0 : i32
    %c0_i32_0 = arith.constant 0 : i32
    return %arg0, %c0_i32 : i32, i32
  }
  func.func @transform_2(%arg0: i32) -> (i32, i32) {
    %c0_i32 = arith.constant 0 : i32
    %c0_i32_0 = arith.constant 0 : i32
    %c0_i32_1 = arith.constant 0 : i32
    return %c0_i32, %c0_i32_0 : i32, i32
  }
  func.func @transform_3(%arg0: i32) -> (i32, i32) {
    %c0_i32 = arith.constant 0 : i32
    %c0_i32_0 = arith.constant 0 : i32
    %c0_i32_1 = arith.constant 0 : i32
    return %c0_i32, %c0_i32_0 : i32, i32
  }
  func.func @transform_4(%arg0: i32) -> (i32, i32) {
    %c0_i32 = arith.constant 0 : i32
    %c0_i32_0 = arith.constant 0 : i32
    %c0_i32_1 = arith.constant 0 : i32
    return %c0_i32, %c0_i32_0 : i32, i32
  }
  func.func @transform_5(%arg0: i32) -> (i32, i32) {
    %c0_i32 = arith.constant 0 : i32
    %c0_i32_0 = arith.constant 0 : i32
    %c0_i32_1 = arith.constant 0 : i32
    return %c0_i32, %c0_i32_0 : i32, i32
  }
  func.func @transform_6(%arg0: i32) -> (i32, i32) {
    %c0_i32 = arith.constant 0 : i32
    %c0_i32_0 = arith.constant 0 : i32
    %c0_i32_1 = arith.constant 0 : i32
    return %c0_i32, %c0_i32_0 : i32, i32
  }
  func.func @transform_7(%arg0: i32) -> (i32, i32) {
    %c0_i32 = arith.constant 0 : i32
    %c0_i32_0 = arith.constant 0 : i32
    %c0_i32_1 = arith.constant 0 : i32
    return %c0_i32, %c0_i32_0 : i32, i32
  }
  func.func @transform_8(%arg0: i32) -> (i32, i32) {
    %c0_i32 = arith.constant 0 : i32
    %c0_i32_0 = arith.constant 0 : i32
    return %arg0, %c0_i32 : i32, i32
  }
}

</mosaic_0001>

<llo_original>
// kernel: tpu_custom_call.1
$region0: #{tpu_custom_call.1}
  #allocation0 [shape = 'u32[]', space=smem, size = 0x4, offset = 0x4, fixed_abs, tag = 'smem constant byte address 0x4 - core index']
  #allocation1 [shape = 'u32[144,128]{1,0:T(1,128)}', space=vmem, size = 0x12000, scoped, tag = 'internal scratch']
  %s0 = inlined_call_operand.vmem [shape: f32[16,32], index: 0, kind: input, shape index: {}]
  %s1 = inlined_call_operand.vmem [shape: f32[2,32], index: 1, kind: input, shape index: {}]
  %s2 = inlined_call_operand.hbm [shape: f32[32,128], index: 2, kind: input, shape index: {}]
  %s3 = inlined_call_operand.hbm [shape: f32[32,256], index: 3, kind: input, shape index: {}]
  %s4 = inlined_call_operand.vmem [shape: f32[128,128], index: 4, kind: input, shape index: {}]
  %s5 = inlined_call_operand.hbm [shape: f32[1,128], index: 5, kind: input, shape index: {}]
  %s6 = inlined_call_operand.vmem [shape: f32[128,4], index: 6, kind: input, shape index: {}]
  %s7 = inlined_call_operand.vmem [shape: f32[4,128], index: 7, kind: input, shape index: {}]
  %s8 = inlined_call_operand.hbm [shape: f32[2,128], index: 8, kind: output, shape index: {}]
  %s9 = sld [smem:[#allocation0]]
  $region54: #{tpu_custom_call.1} parent=0
    _
  %s11 = ssub.s32 1, %s9
  %s12 = scalar_select 0, %s11, %s9
  $region1: #{tpu_custom_call.1} parent=0
    #allocation2 [shape = 'u8[16384]{0}', space=vmem, size = 0x4000, scoped, tag = 'input window, operand 2, single buffered']
    #allocation3 [shape = 's32[1]{0}', space=sflag, size = 0x4, scoped, tag = 'scoped memory for tpu_custom_call.1']
    #allocation4 [shape = 's32[1]{0}', space=sflag, size = 0x4, scoped, tag = 'scoped memory for tpu_custom_call.1']
    #allocation5 [shape = 'u8[32768]{0}', space=vmem, size = 0x8000, scoped, tag = 'input window, operand 3, single buffered']
    #allocation6 [shape = 's32[1]{0}', space=sflag, size = 0x4, scoped, tag = 'scoped memory for tpu_custom_call.1']
    #allocation7 [shape = 'u8[512]{0}', space=vmem, size = 0x400, scoped, tag = 'input window, operand 5, single buffered']
    #allocation8 [shape = 'u8[1024]{0}', space=vmem, size = 0x400, scoped, tag = 'output window, operand 0, single buffered']
    %13 = vsyncpa [#allocation3], 0
    %14 = vsyncpa [#allocation6], 0
    %15 = vsyncpa [#allocation4], 0
    // Predicated region
    $region2: #{tpu_custom_call.1} parent=1 // pred_check
      _
    $region3: #{tpu_custom_call.1} parent=1 // pred_check_branch
      %17 = sbr.rel (0) target = $region5
    $region4: #{tpu_custom_call.1} parent=1 // pred_region
      _
    $region5: #{tpu_custom_call.1} parent=1 // pred_fallthru
      _
    // Predicated region
    $region6: #{tpu_custom_call.1} parent=1 // pred_check
      _
    $region7: #{tpu_custom_call.1} parent=1 // pred_check_branch
      %19 = sbr.rel (0) target = $region9
    $region8: #{tpu_custom_call.1} parent=1 // pred_region
      _
    $region9: #{tpu_custom_call.1} parent=1 // pred_fallthru
      _
    // Predicated region
    $region10: #{tpu_custom_call.1} parent=1 // pred_check
      _
    $region11: #{tpu_custom_call.1} parent=1 // pred_check_branch
      %21 = sbr.rel (0) target = $region13
    $region12: #{tpu_custom_call.1} parent=1 // pred_region
      %s23 = ssub.s32 512, 512
      %24 = vsyncadd [#allocation3], %s23
      %s25 = sshll.u32 [#allocation2], 4
      %s26 = int_to_ptr.vmem [resolvable:$true] %s25
      %31 = dma.hbm_to_vmem [thread:$0]  %s2, 512, %s26, [#allocation3], 128, 128, 8
    $region13: #{tpu_custom_call.1} parent=1 // pred_fallthru
      _
    // Predicated region
    $region14: #{tpu_custom_call.1} parent=1 // pred_check
      _
    $region15: #{tpu_custom_call.1} parent=1 // pred_check_branch
      %33 = sbr.rel (0) target = $region17
    $region16: #{tpu_custom_call.1} parent=1 // pred_region
      %s35 = ssub.s32 1024, 1024
      %36 = vsyncadd [#allocation6], %s35
      %s37 = sshll.u32 [#allocation5], 4
      %s38 = int_to_ptr.vmem [resolvable:$true] %s37
      %43 = dma.hbm_to_vmem [thread:$0]  %s3, 1024, %s38, [#allocation6], 256, 256, 16
    $region17: #{tpu_custom_call.1} parent=1 // pred_fallthru
      _
    // Predicated region
    $region18: #{tpu_custom_call.1} parent=1 // pred_check
      _
    $region19: #{tpu_custom_call.1} parent=1 // pred_check_branch
      %45 = sbr.rel (0) target = $region21
    $region20: #{tpu_custom_call.1} parent=1 // pred_region
      _
    $region21: #{tpu_custom_call.1} parent=1 // pred_fallthru
      _
    // Predicated region
    $region22: #{tpu_custom_call.1} parent=1 // pred_check
      _
    $region23: #{tpu_custom_call.1} parent=1 // pred_check_branch
      %47 = sbr.rel (0) target = $region25
    $region24: #{tpu_custom_call.1} parent=1 // pred_region
      %s49 = ssub.s32 16, 16
      %50 = vsyncadd [#allocation6], %s49
      %s52 = sshll.u32 [#allocation7], 4
      %s53 = int_to_ptr.vmem [resolvable:$true] %s52
      %55 = dma.hbm_to_vmem [thread:$0]  %s5, 16, %s53, [#allocation6]
    $region25: #{tpu_custom_call.1} parent=1 // pred_fallthru
      _
    // Predicated region
    $region26: #{tpu_custom_call.1} parent=1 // pred_check
      _
    $region27: #{tpu_custom_call.1} parent=1 // pred_check_branch
      %57 = sbr.rel (0) target = $region29
    $region28: #{tpu_custom_call.1} parent=1 // pred_region
      _
    $region29: #{tpu_custom_call.1} parent=1 // pred_fallthru
      _
    // Predicated region
    $region30: #{tpu_custom_call.1} parent=1 // pred_check
      _
    $region31: #{tpu_custom_call.1} parent=1 // pred_check_branch
      %59 = sbr.rel (0) target = $region33
    $region32: #{tpu_custom_call.1} parent=1 // pred_region
      _
    $region33: #{tpu_custom_call.1} parent=1 // pred_fallthru
      _
    // Predicated region
    $region34: #{tpu_custom_call.1} parent=1 // pred_check
      _
    $region35: #{tpu_custom_call.1} parent=1 // pred_check_branch
      %61 = sbr.rel (0) target = $region37
    $region36: #{tpu_custom_call.1} parent=1 // pred_region
      %62 = dma.done [#allocation3], 512
    $region37: #{tpu_custom_call.1} parent=1 // pred_fallthru
      _
    // Predicated region
    $region38: #{tpu_custom_call.1} parent=1 // pred_check
      _
    $region39: #{tpu_custom_call.1} parent=1 // pred_check_branch
      %64 = sbr.rel (0) target = $region41
    $region40: #{tpu_custom_call.1} parent=1 // pred_region
      %65 = dma.done [#allocation6], 1024
    $region41: #{tpu_custom_call.1} parent=1 // pred_fallthru
      _
    // Predicated region
    $region42: #{tpu_custom_call.1} parent=1 // pred_check
      _
    $region43: #{tpu_custom_call.1} parent=1 // pred_check_branch
      %67 = sbr.rel (0) target = $region45
    $region44: #{tpu_custom_call.1} parent=1 // pred_region
      %68 = dma.done [#allocation6], 16
    $region45: #{tpu_custom_call.1} parent=1 // pred_fallthru
      _
    %v69 = vld [vmem:[%s0] sm:$0xff]
    %v70 = vld [vmem:[%s0 + $0x8] sm:$0xff]
    %v71 = vld [vmem:[#allocation5] sm:$0xff]
    %v72 = vld [vmem:[#allocation5 + $0x8] sm:$0xff]
    %v73 = vld [vmem:[#allocation5 + $0x10] sm:$0xff]
    %v74 = vld [vmem:[#allocation5 + $0x18] sm:$0xff]
    %v75 = vld [vmem:[#allocation5 + $0x20] sm:$0xff]
    %v76 = vld [vmem:[#allocation5 + $0x28] sm:$0xff]
    %v77 = vld [vmem:[#allocation5 + $0x30] sm:$0xff]
    %v78 = vld [vmem:[#allocation5 + $0x38] sm:$0xff]
    %vm79 = vcmask 261120
    %v81 = vsel %vm79, %v69, 0
    %v84 = vsel %vm79, %v70, 0
    %86 = vmatprep.subr.mxu0 %v72
    %87 = vmatpush1.msra.mxu0 %v71
    %88 = vmatprep.subr.mxu0 %v74
    %89 = vmatpush1.msra.mxu0 %v73
    %90 = vmatprep.subr.mxu0 %v76
    %91 = vmatpush1.msra.mxu0 %v75
    %92 = vmatprep.subr.mxu0 %v78
    %93 = vmatpush1.msra.mxu0 %v77
    %94 = vmatprep.subr.mxu0 0.0
    %95 = vmatpush1.msra.mxu0 0.0
    %96 = vmatprep.subr.mxu0 0.0
    %97 = vmatpush1.msra.mxu0 0.0
    %98 = vmatprep.subr.mxu0 0.0
    %99 = vmatpush1.msra.mxu0 0.0
    %100 = vmatprep.subr.mxu0 0.0
    %101 = vmatpush1.msra.mxu0 0.0
    %102 = vmatprep.subr.mxu0 0.0
    %103 = vmatpush1.msra.mxu0 0.0
    %104 = vmatprep.subr.mxu0 0.0
    %105 = vmatpush1.msra.mxu0 0.0
    %106 = vmatprep.subr.mxu0 0.0
    %107 = vmatpush1.msra.mxu0 0.0
    %108 = vmatprep.subr.mxu0 0.0
    %109 = vmatpush1.msra.mxu0 0.0
    %110 = vmatprep.subr.mxu0 0.0
    %111 = vmatpush1.msra.mxu0 0.0
    %112 = vmatprep.subr.mxu0 0.0
    %113 = vmatpush1.msra.mxu0 0.0
    %114 = vmatprep.subr.mxu0 0.0
    %115 = vmatpush1.msra.mxu0 0.0
    %116 = vmatprep.subr.mxu0 0.0
    %117 = vmatpush1.msra.mxu0 0.0
    %118 = vmatprep.subr.mxu0 0.0
    %119 = vmatpush1.msra.mxu0 0.0
    %120 = vmatprep.subr.mxu0 0.0
    %121 = vmatpush1.msra.mxu0 0.0
    %122 = vmatprep.subr.mxu0 0.0
    %123 = vmatpush1.msra.mxu0 0.0
    %124 = vmatprep.subr.mxu0 0.0
    %125 = vmatpush1.msra.mxu0 0.0
    %126 = vmatprep.subr.mxu0 0.0
    %127 = vmatpush1.msra.mxu0 0.0
    %128 = vmatprep.subr.mxu0 0.0
    %129 = vmatpush1.msra.mxu0 0.0
    %130 = vmatprep.subr.mxu0 0.0
    %131 = vmatpush1.msra.mxu0 0.0
    %132 = vmatprep.subr.mxu0 0.0
    %133 = vmatpush1.msra.mxu0 0.0
    %134 = vmatprep.subr.mxu0 0.0
    %135 = vmatpush1.msra.mxu0 0.0
    %136 = vmatprep.subr.mxu0 0.0
    %137 = vmatpush1.msra.mxu0 0.0
    %138 = vmatprep.subr.mxu0 0.0
    %139 = vmatpush1.msra.mxu0 0.0
    %140 = vmatprep.subr.mxu0 0.0
    %141 = vmatpush1.msra.mxu0 0.0
    %142 = vmatprep.subr.mxu0 0.0
    %143 = vmatpush1.msra.mxu0 0.0
    %144 = vmatprep.subr.mxu0 0.0
    %145 = vmatpush1.msra.mxu0 0.0
    %146 = vmatprep.subr.mxu0 0.0
    %147 = vmatpush1.msra.mxu0 0.0
    %148 = vmatprep.subr.mxu0 0.0
    %149 = vmatpush1.msra.mxu0 0.0
    %150 = vmatprep.mubr.f32.mxu0 0.0
    %151 = vmatmul.mubr.f32.gmra.mrb[0].mxu0 %v81
    %v152 = vpop.f32.mrb[0].mxu0
    %v153 = vadd.f32 0.0, %v152
    %v154 = vpop.f32.mrb[0].mxu0
    %v155 = vadd.f32 0.0, %v154
    %156 = vmatprep.mubr.f32.mxu0 0.0
    %157 = vmatmul.mubr.f32.gmra.mrb[0].mxu0 %v84
    %v158 = vpop.f32.mrb[0].mxu0
    %v159 = vadd.f32 0.0, %v158
    %v160 = vpop.f32.mrb[0].mxu0
    %v161 = vadd.f32 0.0, %v160
    %162 = vdwg.mxu0
    %v163 = vld [vmem:[%s1] sm:$0x3]
    %v164 = vld [vmem:[#allocation2] sm:$0xff]
    %v165 = vld [vmem:[#allocation2 + $0x8] sm:$0xff]
    %v166 = vld [vmem:[#allocation2 + $0x10] sm:$0xff]
    %v167 = vld [vmem:[#allocation2 + $0x18] sm:$0xff]
    %v169 = vsel %vm79, %v163, 0
    %171 = vmatprep.subr.mxu0 0.0
    %172 = vmatpush1.msra.mxu0 %v164
    %173 = vmatprep.subr.mxu0 0.0
    %174 = vmatpush1.msra.mxu0 %v165
    %175 = vmatprep.subr.mxu0 0.0
    %176 = vmatpush1.msra.mxu0 %v166
    %177 = vmatprep.subr.mxu0 0.0
    %178 = vmatpush1.msra.mxu0 %v167
    %179 = vmatprep.subr.mxu0 0.0
    %180 = vmatpush1.msra.mxu0 0.0
    %181 = vmatprep.subr.mxu0 0.0
    %182 = vmatpush1.msra.mxu0 0.0
    %183 = vmatprep.subr.mxu0 0.0
    %184 = vmatpush1.msra.mxu0 0.0
    %185 = vmatprep.subr.mxu0 0.0
    %186 = vmatpush1.msra.mxu0 0.0
    %187 = vmatprep.subr.mxu0 0.0
    %188 = vmatpush1.msra.mxu0 0.0
    %189 = vmatprep.subr.mxu0 0.0
    %190 = vmatpush1.msra.mxu0 0.0
    %191 = vmatprep.subr.mxu0 0.0
    %192 = vmatpush1.msra.mxu0 0.0
    %193 = vmatprep.subr.mxu0 0.0
    %194 = vmatpush1.msra.mxu0 0.0
    %195 = vmatprep.subr.mxu0 0.0
    %196 = vmatpush1.msra.mxu0 0.0
    %197 = vmatprep.subr.mxu0 0.0
    %198 = vmatpush1.msra.mxu0 0.0
    %199 = vmatprep.subr.mxu0 0.0
    %200 = vmatpush1.msra.mxu0 0.0
    %201 = vmatprep.subr.mxu0 0.0
    %202 = vmatpush1.msra.mxu0 0.0
    %203 = vmatprep.subr.mxu0 0.0
    %204 = vmatpush1.msra.mxu0 0.0
    %205 = vmatprep.subr.mxu0 0.0
    %206 = vmatpush1.msra.mxu0 0.0
    %207 = vmatprep.subr.mxu0 0.0
    %208 = vmatpush1.msra.mxu0 0.0
    %209 = vmatprep.subr.mxu0 0.0
    %210 = vmatpush1.msra.mxu0 0.0
    %211 = vmatprep.subr.mxu0 0.0
    %212 = vmatpush1.msra.mxu0 0.0
    %213 = vmatprep.subr.mxu0 0.0
    %214 = vmatpush1.msra.mxu0 0.0
    %215 = vmatprep.subr.mxu0 0.0
    %216 = vmatpush1.msra.mxu0 0.0
    %217 = vmatprep.subr.mxu0 0.0
    %218 = vmatpush1.msra.mxu0 0.0
    %219 = vmatprep.subr.mxu0 0.0
    %220 = vmatpush1.msra.mxu0 0.0
    %221 = vmatprep.subr.mxu0 0.0
    %222 = vmatpush1.msra.mxu0 0.0
    %223 = vmatprep.subr.mxu0 0.0
    %224 = vmatpush1.msra.mxu0 0.0
    %225 = vmatprep.subr.mxu0 0.0
    %226 = vmatpush1.msra.mxu0 0.0
    %227 = vmatprep.subr.mxu0 0.0
    %228 = vmatpush1.msra.mxu0 0.0
    %229 = vmatprep.subr.mxu0 0.0
    %230 = vmatpush1.msra.mxu0 0.0
    %231 = vmatprep.subr.mxu0 0.0
    %232 = vmatpush1.msra.mxu0 0.0
    %233 = vmatprep.subr.mxu0 0.0
    %234 = vmatpush1.msra.mxu0 0.0
    %235 = vmatprep.mubr.f32.mxu0 0.0
    %236 = vmatmul.mubr.f32.gmra.mrb[0].mxu0 %v169
    %v237 = vpop.f32.mrb[0].mxu0
    %v238 = vadd.f32 0.0, %v237
    %v239 = vpop.f32.mrb[0].mxu0
    %240 = vdwg.mxu0
    %v243 = vunpack.c.l.s4 1966171168
    %v244 = vunpack.c.0.s8 %v243
    %v245 = vlaneseq
    %v246 = vshrl.u32 %v245, 7
    %v247 = vsub.s32 %v244, %v246
    %v248 = vrot.slane %v238, %v247
    %v249 = vcombine.high %v248, %v248
    %v251 = vunpack.c.l.s4 1966171168
    %v252 = vunpack.c.0.s8 %v251
    %v253 = vlaneseq
    %v254 = vshrl.u32 %v253, 7
    %v255 = vsub.s32 %v252, %v254
    %v256 = vrot.slane %v248, %v255
    %v258 = vunpack.c.l.s4 1966171168
    %v259 = vunpack.c.0.s8 %v258
    %v260 = vlaneseq
    %v261 = vshrl.u32 %v260, 7
    %v262 = vsub.s32 %v259, %v261
    %v263 = vrot.slane %v249, %v262
    %v264 = vlaneseq
    %v265 = vshrl.u32 %v264, 7
    %v266 = vsub.s32 0, %v265
    %v267 = vrot.slane %v256, %v266
    %v268 = vlaneseq
    %v269 = vshrl.u32 %v268, 7
    %v270 = vsub.s32 0, %v269
    %v271 = vrot.slane %v263, %v270
    %v274 = vmul.f32 %v153, %v267
    %v275 = vmul.f32 %v159, %v271
    %v276 = vld [vmem:[%s6] sm:$0xff]
    %v277 = vld [vmem:[%s6 + $0x8] sm:$0xff]
    %v278 = vld [vmem:[%s6 + $0x10] sm:$0xff]
    %v279 = vld [vmem:[%s6 + $0x18] sm:$0xff]
    %v280 = vld [vmem:[%s6 + $0x20] sm:$0xff]
    %v281 = vld [vmem:[%s6 + $0x28] sm:$0xff]
    %v282 = vld [vmem:[%s6 + $0x30] sm:$0xff]
    %v283 = vld [vmem:[%s6 + $0x38] sm:$0xff]
    %v284 = vld [vmem:[%s6 + $0x40] sm:$0xff]
    %v285 = vld [vmem:[%s6 + $0x48] sm:$0xff]
    %v286 = vld [vmem:[%s6 + $0x50] sm:$0xff]
    %v287 = vld [vmem:[%s6 + $0x58] sm:$0xff]
    %v288 = vld [vmem:[%s6 + $0x60] sm:$0xff]
    %v289 = vld [vmem:[%s6 + $0x68] sm:$0xff]
    %v290 = vld [vmem:[%s6 + $0x70] sm:$0xff]
    %v291 = vld [vmem:[%s6 + $0x78] sm:$0xff]
    %292 = vmatprep.subr.mxu0 0.0
    %v293 = vand.u32 %v276, 4294901760
    %294 = vmatpush1.msra.mxu0 %v293
    %295 = vmatprep.subr.mxu0 0.0
    %v296 = vand.u32 %v277, 4294901760
    %297 = vmatpush1.msra.mxu0 %v296
    %298 = vmatprep.subr.mxu0 0.0
    %v299 = vand.u32 %v278, 4294901760
    %300 = vmatpush1.msra.mxu0 %v299
    %301 = vmatprep.subr.mxu0 0.0
    %v302 = vand.u32 %v279, 4294901760
    %303 = vmatpush1.msra.mxu0 %v302
    %304 = vmatprep.subr.mxu0 0.0
    %v305 = vand.u32 %v280, 4294901760
    %306 = vmatpush1.msra.mxu0 %v305
    %307 = vmatprep.subr.mxu0 0.0
    %v308 = vand.u32 %v281, 4294901760
    %309 = vmatpush1.msra.mxu0 %v308
    %310 = vmatprep.subr.mxu0 0.0
    %v311 = vand.u32 %v282, 4294901760
    %312 = vmatpush1.msra.mxu0 %v311
    %313 = vmatprep.subr.mxu0 0.0
    %v314 = vand.u32 %v283, 4294901760
    %315 = vmatpush1.msra.mxu0 %v314
    %316 = vmatprep.subr.mxu0 0.0
    %v317 = vand.u32 %v284, 4294901760
    %318 = vmatpush1.msra.mxu0 %v317
    %319 = vmatprep.subr.mxu0 0.0
    %v320 = vand.u32 %v285, 4294901760
    %321 = vmatpush1.msra.mxu0 %v320
    %322 = vmatprep.subr.mxu0 0.0
    %v323 = vand.u32 %v286, 4294901760
    %324 = vmatpush1.msra.mxu0 %v323
    %325 = vmatprep.subr.mxu0 0.0
    %v326 = vand.u32 %v287, 4294901760
    %327 = vmatpush1.msra.mxu0 %v326
    %328 = vmatprep.subr.mxu0 0.0
    %v329 = vand.u32 %v288, 4294901760
    %330 = vmatpush1.msra.mxu0 %v329
    %331 = vmatprep.subr.mxu0 0.0
    %v332 = vand.u32 %v289, 4294901760
    %333 = vmatpush1.msra.mxu0 %v332
    %334 = vmatprep.subr.mxu0 0.0
    %v335 = vand.u32 %v290, 4294901760
    %336 = vmatpush1.msra.mxu0 %v335
    %337 = vmatprep.subr.mxu0 0.0
    %v338 = vand.u32 %v291, 4294901760
    %339 = vmatpush1.msra.mxu0 %v338
    %340 = vmatprep.subr.mxu0 0.0
    %341 = vmatpush1.msra.mxu0 0.0
    %342 = vmatprep.subr.mxu0 0.0
    %343 = vmatpush1.msra.mxu0 0.0
    %344 = vmatprep.subr.mxu0 0.0
    %345 = vmatpush1.msra.mxu0 0.0
    %346 = vmatprep.subr.mxu0 0.0
    %347 = vmatpush1.msra.mxu0 0.0
    %348 = vmatprep.subr.mxu0 0.0
    %349 = vmatpush1.msra.mxu0 0.0
    %350 = vmatprep.subr.mxu0 0.0
    %351 = vmatpush1.msra.mxu0 0.0
    %352 = vmatprep.subr.mxu0 0.0
    %353 = vmatpush1.msra.mxu0 0.0
    %354 = vmatprep.subr.mxu0 0.0
    %355 = vmatpush1.msra.mxu0 0.0
    %356 = vmatprep.subr.mxu0 0.0
    %357 = vmatpush1.msra.mxu0 0.0
    %358 = vmatprep.subr.mxu0 0.0
    %359 = vmatpush1.msra.mxu0 0.0
    %360 = vmatprep.subr.mxu0 0.0
    %361 = vmatpush1.msra.mxu0 0.0
    %362 = vmatprep.subr.mxu0 0.0
    %363 = vmatpush1.msra.mxu0 0.0
    %364 = vmatprep.subr.mxu0 0.0
    %365 = vmatpush1.msra.mxu0 0.0
    %366 = vmatprep.subr.mxu0 0.0
    %367 = vmatpush1.msra.mxu0 0.0
    %368 = vmatprep.subr.mxu0 0.0
    %369 = vmatpush1.msra.mxu0 0.0
    %370 = vmatprep.subr.mxu0 0.0
    %371 = vmatpush1.msra.mxu0 0.0
    %372 = vmatprep.mubr.f32.mxu0 0.0
    %v373 = vand.u32 %v274, 4294901760
    %v374 = vsub.f32 %v274, %v373
    %v375 = vand.u32 %v374, 4294901760
    %v376 = vsub.f32 %v374, %v375
    %v377 = vand.u32 %v376, 4294901760
    %378 = vmatmul.mubr.f32.gmra.mrb[0].mxu0 %v377
    %v379 = vpop.f32.mrb[0].mxu0
    %v380 = vadd.f32 0.0, %v379
    %v381 = vpop.f32.mrb[0].mxu0
    %382 = vmatprep.mubr.f32.mxu0 0.0
    %v383 = vand.u32 %v275, 4294901760
    %v384 = vsub.f32 %v275, %v383
    %v385 = vand.u32 %v384, 4294901760
    %v386 = vsub.f32 %v384, %v385
    %v387 = vand.u32 %v386, 4294901760
    %388 = vmatmul.mubr.f32.gmra.mrb[0].mxu0 %v387
    %v389 = vpop.f32.mrb[0].mxu0
    %v390 = vadd.f32 0.0, %v389
    %v391 = vpop.f32.mrb[0].mxu0
    %392 = vdwg.mxu0
    %393 = vmatprep.subr.mxu0 0.0
    %v394 = vand.u32 %v276, 4294901760
    %v395 = vsub.f32 %v276, %v394
    %v396 = vand.u32 %v395, 4294901760
    %v397 = vsub.f32 %v395, %v396
    %v398 = vand.u32 %v397, 4294901760
    %399 = vmatpush1.msra.mxu0 %v398
    %400 = vmatprep.subr.mxu0 0.0
    %v401 = vand.u32 %v277, 4294901760
    %v402 = vsub.f32 %v277, %v401
    %v403 = vand.u32 %v402, 4294901760
    %v404 = vsub.f32 %v402, %v403
    %v405 = vand.u32 %v404, 4294901760
    %406 = vmatpush1.msra.mxu0 %v405
    %407 = vmatprep.subr.mxu0 0.0
    %v408 = vand.u32 %v278, 4294901760
    %v409 = vsub.f32 %v278, %v408
    %v410 = vand.u32 %v409, 4294901760
    %v411 = vsub.f32 %v409, %v410
    %v412 = vand.u32 %v411, 4294901760
    %413 = vmatpush1.msra.mxu0 %v412
    %414 = vmatprep.subr.mxu0 0.0
    %v415 = vand.u32 %v279, 4294901760
    %v416 = vsub.f32 %v279, %v415
    %v417 = vand.u32 %v416, 4294901760
    %v418 = vsub.f32 %v416, %v417
    %v419 = vand.u32 %v418, 4294901760
    %420 = vmatpush1.msra.mxu0 %v419
    %421 = vmatprep.subr.mxu0 0.0
    %v422 = vand.u32 %v280, 4294901760
    %v423 = vsub.f32 %v280, %v422
    %v424 = vand.u32 %v423, 4294901760
    %v425 = vsub.f32 %v423, %v424
    %v426 = vand.u32 %v425, 4294901760
    %427 = vmatpush1.msra.mxu0 %v426
    %428 = vmatprep.subr.mxu0 0.0
    %v429 = vand.u32 %v281, 4294901760
    %v430 = vsub.f32 %v281, %v429
    %v431 = vand.u32 %v430, 4294901760
    %v432 = vsub.f32 %v430, %v431
    %v433 = vand.u32 %v432, 4294901760
    %434 = vmatpush1.msra.mxu0 %v433
    %435 = vmatprep.subr.mxu0 0.0
    %v436 = vand.u32 %v282, 4294901760
    %v437 = vsub.f32 %v282, %v436
    %v438 = vand.u32 %v437, 4294901760
    %v439 = vsub.f32 %v437, %v438
    %v440 = vand.u32 %v439, 4294901760
    %441 = vmatpush1.msra.mxu0 %v440
    %442 = vmatprep.subr.mxu0 0.0
    %v443 = vand.u32 %v283, 4294901760
    %v444 = vsub.f32 %v283, %v443
    %v445 = vand.u32 %v444, 4294901760
    %v446 = vsub.f32 %v444, %v445
    %v447 = vand.u32 %v446, 4294901760
    %448 = vmatpush1.msra.mxu0 %v447
    %449 = vmatprep.subr.mxu0 0.0
    %v450 = vand.u32 %v284, 4294901760
    %v451 = vsub.f32 %v284, %v450
    %v452 = vand.u32 %v451, 4294901760
    %v453 = vsub.f32 %v451, %v452
    %v454 = vand.u32 %v453, 4294901760
    %455 = vmatpush1.msra.mxu0 %v454
    %456 = vmatprep.subr.mxu0 0.0
    %v457 = vand.u32 %v285, 4294901760
    %v458 = vsub.f32 %v285, %v457
    %v459 = vand.u32 %v458, 4294901760
    %v460 = vsub.f32 %v458, %v459
    %v461 = vand.u32 %v460, 4294901760
    %462 = vmatpush1.msra.mxu0 %v461
    %463 = vmatprep.subr.mxu0 0.0
    %v464 = vand.u32 %v286, 4294901760
    %v465 = vsub.f32 %v286, %v464
    %v466 = vand.u32 %v465, 4294901760
    %v467 = vsub.f32 %v465, %v466
    %v468 = vand.u32 %v467, 4294901760
    %469 = vmatpush1.msra.mxu0 %v468
    %470 = vmatprep.subr.mxu0 0.0
    %v471 = vand.u32 %v287, 4294901760
    %v472 = vsub.f32 %v287, %v471
    %v473 = vand.u32 %v472, 4294901760
    %v474 = vsub.f32 %v472, %v473
    %v475 = vand.u32 %v474, 4294901760
    %476 = vmatpush1.msra.mxu0 %v475
    %477 = vmatprep.subr.mxu0 0.0
    %v478 = vand.u32 %v288, 4294901760
    %v479 = vsub.f32 %v288, %v478
    %v480 = vand.u32 %v479, 4294901760
    %v481 = vsub.f32 %v479, %v480
    %v482 = vand.u32 %v481, 4294901760
    %483 = vmatpush1.msra.mxu0 %v482
    %484 = vmatprep.subr.mxu0 0.0
    %v485 = vand.u32 %v289, 4294901760
    %v486 = vsub.f32 %v289, %v485
    %v487 = vand.u32 %v486, 4294901760
    %v488 = vsub.f32 %v486, %v487
    %v489 = vand.u32 %v488, 4294901760
    %490 = vmatpush1.msra.mxu0 %v489
    %491 = vmatprep.subr.mxu0 0.0
    %v492 = vand.u32 %v290, 4294901760
    %v493 = vsub.f32 %v290, %v492
    %v494 = vand.u32 %v493, 4294901760
    %v495 = vsub.f32 %v493, %v494
    %v496 = vand.u32 %v495, 4294901760
    %497 = vmatpush1.msra.mxu0 %v496
    %498 = vmatprep.subr.mxu0 0.0
    %v499 = vand.u32 %v291, 4294901760
    %v500 = vsub.f32 %v291, %v499
    %v501 = vand.u32 %v500, 4294901760
    %v502 = vsub.f32 %v500, %v501
    %v503 = vand.u32 %v502, 4294901760
    %504 = vmatpush1.msra.mxu0 %v503
    %505 = vmatprep.subr.mxu0 0.0
    %506 = vmatpush1.msra.mxu0 0.0
    %507 = vmatprep.subr.mxu0 0.0
    %508 = vmatpush1.msra.mxu0 0.0
    %509 = vmatprep.subr.mxu0 0.0
    %510 = vmatpush1.msra.mxu0 0.0
    %511 = vmatprep.subr.mxu0 0.0
    %512 = vmatpush1.msra.mxu0 0.0
    %513 = vmatprep.subr.mxu0 0.0
    %514 = vmatpush1.msra.mxu0 0.0
    %515 = vmatprep.subr.mxu0 0.0
    %516 = vmatpush1.msra.mxu0 0.0
    %517 = vmatprep.subr.mxu0 0.0
    %518 = vmatpush1.msra.mxu0 0.0
    %519 = vmatprep.subr.mxu0 0.0
    %520 = vmatpush1.msra.mxu0 0.0
    %521 = vmatprep.subr.mxu0 0.0
    %522 = vmatpush1.msra.mxu0 0.0
    %523 = vmatprep.subr.mxu0 0.0
    %524 = vmatpush1.msra.mxu0 0.0
    %525 = vmatprep.subr.mxu0 0.0
    %526 = vmatpush1.msra.mxu0 0.0
    %527 = vmatprep.subr.mxu0 0.0
    %528 = vmatpush1.msra.mxu0 0.0
    %529 = vmatprep.subr.mxu0 0.0
    %530 = vmatpush1.msra.mxu0 0.0
    %531 = vmatprep.subr.mxu0 0.0
    %532 = vmatpush1.msra.mxu0 0.0
    %533 = vmatprep.subr.mxu0 0.0
    %534 = vmatpush1.msra.mxu0 0.0
    %535 = vmatprep.subr.mxu0 0.0
    %536 = vmatpush1.msra.mxu0 0.0
    %537 = vmatprep.mubr.f32.mxu0 0.0
    %v538 = vand.u32 %v274, 4294901760
    %539 = vmatmul.mubr.f32.gmra.mrb[0].mxu0 %v538
    %v540 = vpop.f32.mrb[0].mxu0
    %v541 = vadd.f32 %v380, %v540
    %v542 = vpop.f32.mrb[0].mxu0
    %543 = vmatprep.mubr.f32.mxu0 0.0
    %v544 = vand.u32 %v275, 4294901760
    %545 = vmatmul.mubr.f32.gmra.mrb[0].mxu0 %v544
    %v546 = vpop.f32.mrb[0].mxu0
    %v547 = vadd.f32 %v390, %v546
    %v548 = vpop.f32.mrb[0].mxu0
    %549 = vdwg.mxu0
    %550 = vmatprep.subr.mxu0 0.0
    %v551 = vand.u32 %v276, 4294901760
    %v552 = vsub.f32 %v276, %v551
    %553 = vmatpush1.msra.mxu0 %v552
    %554 = vmatprep.subr.mxu0 0.0
    %v555 = vand.u32 %v277, 4294901760
    %v556 = vsub.f32 %v277, %v555
    %557 = vmatpush1.msra.mxu0 %v556
    %558 = vmatprep.subr.mxu0 0.0
    %v559 = vand.u32 %v278, 4294901760
    %v560 = vsub.f32 %v278, %v559
    %561 = vmatpush1.msra.mxu0 %v560
    %562 = vmatprep.subr.mxu0 0.0
    %v563 = vand.u32 %v279, 4294901760
    %v564 = vsub.f32 %v279, %v563
    %565 = vmatpush1.msra.mxu0 %v564
    %566 = vmatprep.subr.mxu0 0.0
    %v567 = vand.u32 %v280, 4294901760
    %v568 = vsub.f32 %v280, %v567
    %569 = vmatpush1.msra.mxu0 %v568
    %570 = vmatprep.subr.mxu0 0.0
    %v571 = vand.u32 %v281, 4294901760
    %v572 = vsub.f32 %v281, %v571
    %573 = vmatpush1.msra.mxu0 %v572
    %574 = vmatprep.subr.mxu0 0.0
    %v575 = vand.u32 %v282, 4294901760
    %v576 = vsub.f32 %v282, %v575
    %577 = vmatpush1.msra.mxu0 %v576
    %578 = vmatprep.subr.mxu0 0.0
    %v579 = vand.u32 %v283, 4294901760
    %v580 = vsub.f32 %v283, %v579
    %581 = vmatpush1.msra.mxu0 %v580
    %582 = vmatprep.subr.mxu0 0.0
    %v583 = vand.u32 %v284, 4294901760
    %v584 = vsub.f32 %v284, %v583
    %585 = vmatpush1.msra.mxu0 %v584
    %586 = vmatprep.subr.mxu0 0.0
    %v587 = vand.u32 %v285, 4294901760
    %v588 = vsub.f32 %v285, %v587
    %589 = vmatpush1.msra.mxu0 %v588
    %590 = vmatprep.subr.mxu0 0.0
    %v591 = vand.u32 %v286, 4294901760
    %v592 = vsub.f32 %v286, %v591
    %593 = vmatpush1.msra.mxu0 %v592
    %594 = vmatprep.subr.mxu0 0.0
    %v595 = vand.u32 %v287, 4294901760
    %v596 = vsub.f32 %v287, %v595
    %597 = vmatpush1.msra.mxu0 %v596
    %598 = vmatprep.subr.mxu0 0.0
    %v599 = vand.u32 %v288, 4294901760
    %v600 = vsub.f32 %v288, %v599
    %601 = vmatpush1.msra.mxu0 %v600
    %602 = vmatprep.subr.mxu0 0.0
    %v603 = vand.u32 %v289, 4294901760
    %v604 = vsub.f32 %v289, %v603
    %605 = vmatpush1.msra.mxu0 %v604
    %606 = vmatprep.subr.mxu0 0.0
    %v607 = vand.u32 %v290, 4294901760
    %v608 = vsub.f32 %v290, %v607
    %609 = vmatpush1.msra.mxu0 %v608
    %610 = vmatprep.subr.mxu0 0.0
    %v611 = vand.u32 %v291, 4294901760
    %v612 = vsub.f32 %v291, %v611
    %613 = vmatpush1.msra.mxu0 %v612
    %614 = vmatprep.subr.mxu0 0.0
    %615 = vmatpush1.msra.mxu0 0.0
    %616 = vmatprep.subr.mxu0 0.0
    %617 = vmatpush1.msra.mxu0 0.0
    %618 = vmatprep.subr.mxu0 0.0
    %619 = vmatpush1.msra.mxu0 0.0
    %620 = vmatprep.subr.mxu0 0.0
    %621 = vmatpush1.msra.mxu0 0.0
    %622 = vmatprep.subr.mxu0 0.0
    %623 = vmatpush1.msra.mxu0 0.0
    %624 = vmatprep.subr.mxu0 0.0
    %625 = vmatpush1.msra.mxu0 0.0
    %626 = vmatprep.subr.mxu0 0.0
    %627 = vmatpush1.msra.mxu0 0.0
    %628 = vmatprep.subr.mxu0 0.0
    %629 = vmatpush1.msra.mxu0 0.0
    %630 = vmatprep.subr.mxu0 0.0
    %631 = vmatpush1.msra.mxu0 0.0
    %632 = vmatprep.subr.mxu0 0.0
    %633 = vmatpush1.msra.mxu0 0.0
    %634 = vmatprep.subr.mxu0 0.0
    %635 = vmatpush1.msra.mxu0 0.0
    %636 = vmatprep.subr.mxu0 0.0
    %637 = vmatpush1.msra.mxu0 0.0
    %638 = vmatprep.subr.mxu0 0.0
    %639 = vmatpush1.msra.mxu0 0.0
    %640 = vmatprep.subr.mxu0 0.0
    %641 = vmatpush1.msra.mxu0 0.0
    %642 = vmatprep.subr.mxu0 0.0
    %643 = vmatpush1.msra.mxu0 0.0
    %644 = vmatprep.subr.mxu0 0.0
    %645 = vmatpush1.msra.mxu0 0.0
    %646 = vmatprep.mubr.f32.mxu0 0.0
    %v647 = vand.u32 %v274, 4294901760
    %v648 = vsub.f32 %v274, %v647
    %649 = vmatmul.mubr.f32.gmra.mrb[0].mxu0 %v648
    %v650 = vpop.f32.mrb[0].mxu0
    %v651 = vadd.f32 %v541, %v650
    %v652 = vpop.f32.mrb[0].mxu0
    %653 = vmatprep.mubr.f32.mxu0 0.0
    %v654 = vand.u32 %v275, 4294901760
    %v655 = vsub.f32 %v275, %v654
    %656 = vmatmul.mubr.f32.gmra.mrb[0].mxu0 %v655
    %v657 = vpop.f32.mrb[0].mxu0
    %v658 = vadd.f32 %v547, %v657
    %v659 = vpop.f32.mrb[0].mxu0
    %660 = vdwg.mxu0
    %661 = vmatprep.subr.mxu0 0.0
    %v662 = vand.u32 %v276, 4294901760
    %663 = vmatpush1.msra.mxu0 %v662
    %664 = vmatprep.subr.mxu0 0.0
    %v665 = vand.u32 %v277, 4294901760
    %666 = vmatpush1.msra.mxu0 %v665
    %667 = vmatprep.subr.mxu0 0.0
    %v668 = vand.u32 %v278, 4294901760
    %669 = vmatpush1.msra.mxu0 %v668
    %670 = vmatprep.subr.mxu0 0.0
    %v671 = vand.u32 %v279, 4294901760
    %672 = vmatpush1.msra.mxu0 %v671
    %673 = vmatprep.subr.mxu0 0.0
    %v674 = vand.u32 %v280, 4294901760
    %675 = vmatpush1.msra.mxu0 %v674
    %676 = vmatprep.subr.mxu0 0.0
    %v677 = vand.u32 %v281, 4294901760
    %678 = vmatpush1.msra.mxu0 %v677
    %679 = vmatprep.subr.mxu0 0.0
    %v680 = vand.u32 %v282, 4294901760
    %681 = vmatpush1.msra.mxu0 %v680
    %682 = vmatprep.subr.mxu0 0.0
    %v683 = vand.u32 %v283, 4294901760
    %684 = vmatpush1.msra.mxu0 %v683
    %685 = vmatprep.subr.mxu0 0.0
    %v686 = vand.u32 %v284, 4294901760
    %687 = vmatpush1.msra.mxu0 %v686
    %688 = vmatprep.subr.mxu0 0.0
    %v689 = vand.u32 %v285, 4294901760
    %690 = vmatpush1.msra.mxu0 %v689
    %691 = vmatprep.subr.mxu0 0.0
    %v692 = vand.u32 %v286, 4294901760
    %693 = vmatpush1.msra.mxu0 %v692
    %694 = vmatprep.subr.mxu0 0.0
    %v695 = vand.u32 %v287, 4294901760
    %696 = vmatpush1.msra.mxu0 %v695
    %697 = vmatprep.subr.mxu0 0.0
    %v698 = vand.u32 %v288, 4294901760
    %699 = vmatpush1.msra.mxu0 %v698
    %700 = vmatprep.subr.mxu0 0.0
    %v701 = vand.u32 %v289, 4294901760
    %702 = vmatpush1.msra.mxu0 %v701
    %703 = vmatprep.subr.mxu0 0.0
    %v704 = vand.u32 %v290, 4294901760
    %705 = vmatpush1.msra.mxu0 %v704
    %706 = vmatprep.subr.mxu0 0.0
    %v707 = vand.u32 %v291, 4294901760
    %708 = vmatpush1.msra.mxu0 %v707
    %709 = vmatprep.subr.mxu0 0.0
    %710 = vmatpush1.msra.mxu0 0.0
    %711 = vmatprep.subr.mxu0 0.0
    %712 = vmatpush1.msra.mxu0 0.0
    %713 = vmatprep.subr.mxu0 0.0
    %714 = vmatpush1.msra.mxu0 0.0
    %715 = vmatprep.subr.mxu0 0.0
    %716 = vmatpush1.msra.mxu0 0.0
    %717 = vmatprep.subr.mxu0 0.0
    %718 = vmatpush1.msra.mxu0 0.0
    %719 = vmatprep.subr.mxu0 0.0
    %720 = vmatpush1.msra.mxu0 0.0
    %721 = vmatprep.subr.mxu0 0.0
    %722 = vmatpush1.msra.mxu0 0.0
    %723 = vmatprep.subr.mxu0 0.0
    %724 = vmatpush1.msra.mxu0 0.0
    %725 = vmatprep.subr.mxu0 0.0
    %726 = vmatpush1.msra.mxu0 0.0
    %727 = vmatprep.subr.mxu0 0.0
    %728 = vmatpush1.msra.mxu0 0.0
    %729 = vmatprep.subr.mxu0 0.0
    %730 = vmatpush1.msra.mxu0 0.0
    %731 = vmatprep.subr.mxu0 0.0
    %732 = vmatpush1.msra.mxu0 0.0
    %733 = vmatprep.subr.mxu0 0.0
    %734 = vmatpush1.msra.mxu0 0.0
    %735 = vmatprep.subr.mxu0 0.0
    %736 = vmatpush1.msra.mxu0 0.0
    %737 = vmatprep.subr.mxu0 0.0
    %738 = vmatpush1.msra.mxu0 0.0
    %739 = vmatprep.subr.mxu0 0.0
    %740 = vmatpush1.msra.mxu0 0.0
    %741 = vmatprep.mubr.f32.mxu0 0.0
    %v742 = vand.u32 %v274, 4294901760
    %v743 = vsub.f32 %v274, %v742
    %v744 = vand.u32 %v743, 4294901760
    %745 = vmatmul.mubr.f32.gmra.mrb[0].mxu0 %v744
    %v746 = vpop.f32.mrb[0].mxu0
    %v747 = vadd.f32 %v651, %v746
    %v748 = vpop.f32.mrb[0].mxu0
    %749 = vmatprep.mubr.f32.mxu0 0.0
    %v750 = vand.u32 %v275, 4294901760
    %v751 = vsub.f32 %v275, %v750
    %v752 = vand.u32 %v751, 4294901760
    %753 = vmatmul.mubr.f32.gmra.mrb[0].mxu0 %v752
    %v754 = vpop.f32.mrb[0].mxu0
    %v755 = vadd.f32 %v658, %v754
    %v756 = vpop.f32.mrb[0].mxu0
    %757 = vdwg.mxu0
    %758 = vmatprep.subr.mxu0 0.0
    %v759 = vand.u32 %v276, 4294901760
    %v760 = vsub.f32 %v276, %v759
    %v761 = vand.u32 %v760, 4294901760
    %762 = vmatpush1.msra.mxu0 %v761
    %763 = vmatprep.subr.mxu0 0.0
    %v764 = vand.u32 %v277, 4294901760
    %v765 = vsub.f32 %v277, %v764
    %v766 = vand.u32 %v765, 4294901760
    %767 = vmatpush1.msra.mxu0 %v766
    %768 = vmatprep.subr.mxu0 0.0
    %v769 = vand.u32 %v278, 4294901760
    %v770 = vsub.f32 %v278, %v769
    %v771 = vand.u32 %v770, 4294901760
    %772 = vmatpush1.msra.mxu0 %v771
    %773 = vmatprep.subr.mxu0 0.0
    %v774 = vand.u32 %v279, 4294901760
    %v775 = vsub.f32 %v279, %v774
    %v776 = vand.u32 %v775, 4294901760
    %777 = vmatpush1.msra.mxu0 %v776
    %778 = vmatprep.subr.mxu0 0.0
    %v779 = vand.u32 %v280, 4294901760
    %v780 = vsub.f32 %v280, %v779
    %v781 = vand.u32 %v780, 4294901760
    %782 = vmatpush1.msra.mxu0 %v781
    %783 = vmatprep.subr.mxu0 0.0
    %v784 = vand.u32 %v281, 4294901760
    %v785 = vsub.f32 %v281, %v784
    %v786 = vand.u32 %v785, 4294901760
    %787 = vmatpush1.msra.mxu0 %v786
    %788 = vmatprep.subr.mxu0 0.0
    %v789 = vand.u32 %v282, 4294901760
    %v790 = vsub.f32 %v282, %v789
    %v791 = vand.u32 %v790, 4294901760
    %792 = vmatpush1.msra.mxu0 %v791
    %793 = vmatprep.subr.mxu0 0.0
    %v794 = vand.u32 %v283, 4294901760
    %v795 = vsub.f32 %v283, %v794
    %v796 = vand.u32 %v795, 4294901760
    %797 = vmatpush1.msra.mxu0 %v796
    %798 = vmatprep.subr.mxu0 0.0
    %v799 = vand.u32 %v284, 4294901760
    %v800 = vsub.f32 %v284, %v799
    %v801 = vand.u32 %v800, 4294901760
    %802 = vmatpush1.msra.mxu0 %v801
    %803 = vmatprep.subr.mxu0 0.0
    %v804 = vand.u32 %v285, 4294901760
    %v805 = vsub.f32 %v285, %v804
    %v806 = vand.u32 %v805, 4294901760
    %807 = vmatpush1.msra.mxu0 %v806
    %808 = vmatprep.subr.mxu0 0.0
    %v809 = vand.u32 %v286, 4294901760
    %v810 = vsub.f32 %v286, %v809
    %v811 = vand.u32 %v810, 4294901760
    %812 = vmatpush1.msra.mxu0 %v811
    %813 = vmatprep.subr.mxu0 0.0
    %v814 = vand.u32 %v287, 4294901760
    %v815 = vsub.f32 %v287, %v814
    %v816 = vand.u32 %v815, 4294901760
    %817 = vmatpush1.msra.mxu0 %v816
    %818 = vmatprep.subr.mxu0 0.0
    %v819 = vand.u32 %v288, 4294901760
    %v820 = vsub.f32 %v288, %v819
    %v821 = vand.u32 %v820, 4294901760
    %822 = vmatpush1.msra.mxu0 %v821
    %823 = vmatprep.subr.mxu0 0.0
    %v824 = vand.u32 %v289, 4294901760
    %v825 = vsub.f32 %v289, %v824
    %v826 = vand.u32 %v825, 4294901760
    %827 = vmatpush1.msra.mxu0 %v826
    %828 = vmatprep.subr.mxu0 0.0
    %v829 = vand.u32 %v290, 4294901760
    %v830 = vsub.f32 %v290, %v829
    %v831 = vand.u32 %v830, 4294901760
    %832 = vmatpush1.msra.mxu0 %v831
    %833 = vmatprep.subr.mxu0 0.0
    %v834 = vand.u32 %v291, 4294901760
    %v835 = vsub.f32 %v291, %v834
    %v836 = vand.u32 %v835, 4294901760
    %837 = vmatpush1.msra.mxu0 %v836
    %838 = vmatprep.subr.mxu0 0.0
    %839 = vmatpush1.msra.mxu0 0.0
    %840 = vmatprep.subr.mxu0 0.0
    %841 = vmatpush1.msra.mxu0 0.0
    %842 = vmatprep.subr.mxu0 0.0
    %843 = vmatpush1.msra.mxu0 0.0
    %844 = vmatprep.subr.mxu0 0.0
    %845 = vmatpush1.msra.mxu0 0.0
    %846 = vmatprep.subr.mxu0 0.0
    %847 = vmatpush1.msra.mxu0 0.0
    %848 = vmatprep.subr.mxu0 0.0
    %849 = vmatpush1.msra.mxu0 0.0
    %850 = vmatprep.subr.mxu0 0.0
    %851 = vmatpush1.msra.mxu0 0.0
    %852 = vmatprep.subr.mxu0 0.0
    %853 = vmatpush1.msra.mxu0 0.0
    %854 = vmatprep.subr.mxu0 0.0
    %855 = vmatpush1.msra.mxu0 0.0
    %856 = vmatprep.subr.mxu0 0.0
    %857 = vmatpush1.msra.mxu0 0.0
    %858 = vmatprep.subr.mxu0 0.0
    %859 = vmatpush1.msra.mxu0 0.0
    %860 = vmatprep.subr.mxu0 0.0
    %861 = vmatpush1.msra.mxu0 0.0
    %862 = vmatprep.subr.mxu0 0.0
    %863 = vmatpush1.msra.mxu0 0.0
    %864 = vmatprep.subr.mxu0 0.0
    %865 = vmatpush1.msra.mxu0 0.0
    %866 = vmatprep.subr.mxu0 0.0
    %867 = vmatpush1.msra.mxu0 0.0
    %868 = vmatprep.subr.mxu0 0.0
    %869 = vmatpush1.msra.mxu0 0.0
    %870 = vmatprep.mubr.f32.mxu0 0.0
    %v871 = vand.u32 %v274, 4294901760
    %872 = vmatmul.mubr.f32.gmra.mrb[0].mxu0 %v871
    %v873 = vpop.f32.mrb[0].mxu0
    %v874 = vadd.f32 %v747, %v873
    %v875 = vpop.f32.mrb[0].mxu0
    %876 = vmatprep.mubr.f32.mxu0 0.0
    %v877 = vand.u32 %v275, 4294901760
    %878 = vmatmul.mubr.f32.gmra.mrb[0].mxu0 %v877
    %v879 = vpop.f32.mrb[0].mxu0
    %v880 = vadd.f32 %v755, %v879
    %v881 = vpop.f32.mrb[0].mxu0
    %882 = vdwg.mxu0
    %883 = vmatprep.subr.mxu0 0.0
    %v884 = vand.u32 %v276, 4294901760
    %885 = vmatpush1.msra.mxu0 %v884
    %886 = vmatprep.subr.mxu0 0.0
    %v887 = vand.u32 %v277, 4294901760
    %888 = vmatpush1.msra.mxu0 %v887
    %889 = vmatprep.subr.mxu0 0.0
    %v890 = vand.u32 %v278, 4294901760
    %891 = vmatpush1.msra.mxu0 %v890
    %892 = vmatprep.subr.mxu0 0.0
    %v893 = vand.u32 %v279, 4294901760
    %894 = vmatpush1.msra.mxu0 %v893
    %895 = vmatprep.subr.mxu0 0.0
    %v896 = vand.u32 %v280, 4294901760
    %897 = vmatpush1.msra.mxu0 %v896
    %898 = vmatprep.subr.mxu0 0.0
    %v899 = vand.u32 %v281, 4294901760
    %900 = vmatpush1.msra.mxu0 %v899
    %901 = vmatprep.subr.mxu0 0.0
    %v902 = vand.u32 %v282, 4294901760
    %903 = vmatpush1.msra.mxu0 %v902
    %904 = vmatprep.subr.mxu0 0.0
    %v905 = vand.u32 %v283, 4294901760
    %906 = vmatpush1.msra.mxu0 %v905
    %907 = vmatprep.subr.mxu0 0.0
    %v908 = vand.u32 %v284, 4294901760
    %909 = vmatpush1.msra.mxu0 %v908
    %910 = vmatprep.subr.mxu0 0.0
    %v911 = vand.u32 %v285, 4294901760
    %912 = vmatpush1.msra.mxu0 %v911
    %913 = vmatprep.subr.mxu0 0.0
    %v914 = vand.u32 %v286, 4294901760
    %915 = vmatpush1.msra.mxu0 %v914
    %916 = vmatprep.subr.mxu0 0.0
    %v917 = vand.u32 %v287, 4294901760
    %918 = vmatpush1.msra.mxu0 %v917
    %919 = vmatprep.subr.mxu0 0.0
    %v920 = vand.u32 %v288, 4294901760
    %921 = vmatpush1.msra.mxu0 %v920
    %922 = vmatprep.subr.mxu0 0.0
    %v923 = vand.u32 %v289, 4294901760
    %924 = vmatpush1.msra.mxu0 %v923
    %925 = vmatprep.subr.mxu0 0.0
    %v926 = vand.u32 %v290, 4294901760
    %927 = vmatpush1.msra.mxu0 %v926
    %928 = vmatprep.subr.mxu0 0.0
    %v929 = vand.u32 %v291, 4294901760
    %930 = vmatpush1.msra.mxu0 %v929
    %931 = vmatprep.subr.mxu0 0.0
    %932 = vmatpush1.msra.mxu0 0.0
    %933 = vmatprep.subr.mxu0 0.0
    %934 = vmatpush1.msra.mxu0 0.0
    %935 = vmatprep.subr.mxu0 0.0
    %936 = vmatpush1.msra.mxu0 0.0
    %937 = vmatprep.subr.mxu0 0.0
    %938 = vmatpush1.msra.mxu0 0.0
    %939 = vmatprep.subr.mxu0 0.0
    %940 = vmatpush1.msra.mxu0 0.0
    %941 = vmatprep.subr.mxu0 0.0
    %942 = vmatpush1.msra.mxu0 0.0
    %943 = vmatprep.subr.mxu0 0.0
    %944 = vmatpush1.msra.mxu0 0.0
    %945 = vmatprep.subr.mxu0 0.0
    %946 = vmatpush1.msra.mxu0 0.0
    %947 = vmatprep.subr.mxu0 0.0
    %948 = vmatpush1.msra.mxu0 0.0
    %949 = vmatprep.subr.mxu0 0.0
    %950 = vmatpush1.msra.mxu0 0.0
    %951 = vmatprep.subr.mxu0 0.0
    %952 = vmatpush1.msra.mxu0 0.0
    %953 = vmatprep.subr.mxu0 0.0
    %954 = vmatpush1.msra.mxu0 0.0
    %955 = vmatprep.subr.mxu0 0.0
    %956 = vmatpush1.msra.mxu0 0.0
    %957 = vmatprep.subr.mxu0 0.0
    %958 = vmatpush1.msra.mxu0 0.0
    %959 = vmatprep.subr.mxu0 0.0
    %960 = vmatpush1.msra.mxu0 0.0
    %961 = vmatprep.subr.mxu0 0.0
    %962 = vmatpush1.msra.mxu0 0.0
    %963 = vmatprep.mubr.f32.mxu0 0.0
    %v964 = vand.u32 %v274, 4294901760
    %965 = vmatmul.mubr.f32.gmra.mrb[0].mxu0 %v964
    %v966 = vpop.f32.mrb[0].mxu0
    %v967 = vadd.f32 %v874, %v966
    %v968 = vpop.f32.mrb[0].mxu0
    %969 = vmatprep.mubr.f32.mxu0 0.0
    %v970 = vand.u32 %v275, 4294901760
    %971 = vmatmul.mubr.f32.gmra.mrb[0].mxu0 %v970
    %v972 = vpop.f32.mrb[0].mxu0
    %v973 = vadd.f32 %v880, %v972
    %v974 = vpop.f32.mrb[0].mxu0
    %975 = vdwg.mxu0
    %vm976 = vcmask 31744
    %v977 = vsel %vm976, %v967, -inf
    %v978 = vrot.slane %v977, 4
    %v979 = vmax.f32 %v977, %v978
    %v980 = vrot.slane %v979, 2
    %v981 = vmax.f32 %v979, %v980
    %v982 = vrot.slane %v981, 1
    %v983 = vmax.f32 %v981, %v982
    %v984 = vsel %vm976, %v973, -inf
    %v985 = vrot.slane %v984, 4
    %v986 = vmax.f32 %v984, %v985
    %v987 = vrot.slane %v986, 2
    %v988 = vmax.f32 %v986, %v987
    %v989 = vrot.slane %v988, 1
    %v990 = vmax.f32 %v988, %v989
    %v991 = vsub.f32 %v967, %v983
    %v992 = vsub.f32 %v973, %v990
    %v993 = vmul.f32 %v991, 1.442695
    %v994 = vpow.pop %v993
    %v995 = vmul.f32 %v992, 1.442695
    %v996 = vpow.pop %v995
    %v997 = vsel %vm976, %v994, 0.0
    %v998 = vrot.slane %v997, 4
    %v999 = vadd.f32 %v997, %v998
    %v1000 = vrot.slane %v999, 2
    %v1001 = vadd.f32 %v999, %v1000
    %v1002 = vrot.slane %v1001, 1
    %v1003 = vadd.f32 %v1001, %v1002
    %v1004 = vsel %vm976, %v996, 0.0
    %v1005 = vrot.slane %v1004, 4
    %v1006 = vadd.f32 %v1004, %v1005
    %v1007 = vrot.slane %v1006, 2
    %v1008 = vadd.f32 %v1006, %v1007
    %v1009 = vrot.slane %v1008, 1
    %v1010 = vadd.f32 %v1008, %v1009
    %v1011 = vrcp.pop %v1003
    %v1012 = vrcp.pop %v1010
    %v1013 = vmul.f32 %v1003, %v1011
    %v1014 = vmul.f32 %v1010, %v1012
    %v1015 = vsub.f32 2.0, %v1013
    %v1016 = vsub.f32 2.0, %v1014
    %v1017 = vmul.f32 %v1011, %v1015
    %v1018 = vmul.f32 %v1012, %v1016
    %v1019 = vmul.f32 %v994, %v1017
    %v1020 = vmul.f32 %v996, %v1018
    %v1021 = vld [vmem:[%s7] sm:$0xf]
    %v1023 = vsel %vm976, %v1019, 0
    %v1026 = vsel %vm976, %v1020, 0
    %vm1028 = vcmask 1043456
    %v1030 = vsel %vm1028, %v1021, 0
    %1032 = vmatprep.subr.mxu0 0.0
    %v1033 = vand.u32 %v1030, 4294901760
    %1034 = vmatpush1.msra.mxu0 %v1033
    %1035 = vmatprep.subr.mxu0 0.0
    %1036 = vmatpush1.msra.mxu0 0.0
    %1037 = vmatprep.subr.mxu0 0.0
    %1038 = vmatpush1.msra.mxu0 0.0
    %1039 = vmatprep.subr.mxu0 0.0
    %1040 = vmatpush1.msra.mxu0 0.0
    %1041 = vmatprep.subr.mxu0 0.0
    %1042 = vmatpush1.msra.mxu0 0.0
    %1043 = vmatprep.subr.mxu0 0.0
    %1044 = vmatpush1.msra.mxu0 0.0
    %1045 = vmatprep.subr.mxu0 0.0
    %1046 = vmatpush1.msra.mxu0 0.0
    %1047 = vmatprep.subr.mxu0 0.0
    %1048 = vmatpush1.msra.mxu0 0.0
    %1049 = vmatprep.subr.mxu0 0.0
    %1050 = vmatpush1.msra.mxu0 0.0
    %1051 = vmatprep.subr.mxu0 0.0
    %1052 = vmatpush1.msra.mxu0 0.0
    %1053 = vmatprep.subr.mxu0 0.0
    %1054 = vmatpush1.msra.mxu0 0.0
    %1055 = vmatprep.subr.mxu0 0.0
    %1056 = vmatpush1.msra.mxu0 0.0
    %1057 = vmatprep.subr.mxu0 0.0
    %1058 = vmatpush1.msra.mxu0 0.0
    %1059 = vmatprep.subr.mxu0 0.0
    %1060 = vmatpush1.msra.mxu0 0.0
    %1061 = vmatprep.subr.mxu0 0.0
    %1062 = vmatpush1.msra.mxu0 0.0
    %1063 = vmatprep.subr.mxu0 0.0
    %1064 = vmatpush1.msra.mxu0 0.0
    %1065 = vmatprep.subr.mxu0 0.0
    %1066 = vmatpush1.msra.mxu0 0.0
    %1067 = vmatprep.subr.mxu0 0.0
    %1068 = vmatpush1.msra.mxu0 0.0
    %1069 = vmatprep.subr.mxu0 0.0
    %1070 = vmatpush1.msra.mxu0 0.0
    %1071 = vmatprep.subr.mxu0 0.0
    %1072 = vmatpush1.msra.mxu0 0.0
    %1073 = vmatprep.subr.mxu0 0.0
    %1074 = vmatpush1.msra.mxu0 0.0
    %1075 = vmatprep.subr.mxu0 0.0
    %1076 = vmatpush1.msra.mxu0 0.0
    %1077 = vmatprep.subr.mxu0 0.0
    %1078 = vmatpush1.msra.mxu0 0.0
    %1079 = vmatprep.subr.mxu0 0.0
    %1080 = vmatpush1.msra.mxu0 0.0
    %1081 = vmatprep.subr.mxu0 0.0
    %1082 = vmatpush1.msra.mxu0 0.0
    %1083 = vmatprep.subr.mxu0 0.0
    %1084 = vmatpush1.msra.mxu0 0.0
    %1085 = vmatprep.subr.mxu0 0.0
    %1086 = vmatpush1.msra.mxu0 0.0
    %1087 = vmatprep.subr.mxu0 0.0
    %1088 = vmatpush1.msra.mxu0 0.0
    %1089 = vmatprep.subr.mxu0 0.0
    %1090 = vmatpush1.msra.mxu0 0.0
    %1091 = vmatprep.subr.mxu0 0.0
    %1092 = vmatpush1.msra.mxu0 0.0
    %1093 = vmatprep.subr.mxu0 0.0
    %1094 = vmatpush1.msra.mxu0 0.0
    %1095 = vmatprep.subr.mxu0 0.0
    %1096 = vmatpush1.msra.mxu0 0.0
    %1097 = vmatprep.mubr.f32.mxu0 0.0
    %v1098 = vand.u32 %v1023, 4294901760
    %v1099 = vsub.f32 %v1023, %v1098
    %v1100 = vand.u32 %v1099, 4294901760
    %v1101 = vsub.f32 %v1099, %v1100
    %v1102 = vand.u32 %v1101, 4294901760
    %1103 = vmatmul.mubr.f32.gmra.mrb[0].mxu0 %v1102
    %v1104 = vpop.f32.mrb[0].mxu0
    %v1105 = vadd.f32 0.0, %v1104
    %v1106 = vpop.f32.mrb[0].mxu0
    %1107 = vmatprep.mubr.f32.mxu0 0.0
    %v1108 = vand.u32 %v1026, 4294901760
    %v1109 = vsub.f32 %v1026, %v1108
    %v1110 = vand.u32 %v1109, 4294901760
    %v1111 = vsub.f32 %v1109, %v1110
    %v1112 = vand.u32 %v1111, 4294901760
    %1113 = vmatmul.mubr.f32.gmra.mrb[0].mxu0 %v1112
    %v1114 = vpop.f32.mrb[0].mxu0
    %v1115 = vadd.f32 0.0, %v1114
    %v1116 = vpop.f32.mrb[0].mxu0
    %1117 = vdwg.mxu0
    %1118 = vmatprep.subr.mxu0 0.0
    %v1119 = vand.u32 %v1030, 4294901760
    %v1120 = vsub.f32 %v1030, %v1119
    %v1121 = vand.u32 %v1120, 4294901760
    %v1122 = vsub.f32 %v1120, %v1121
    %v1123 = vand.u32 %v1122, 4294901760
    %1124 = vmatpush1.msra.mxu0 %v1123
    %1125 = vmatprep.subr.mxu0 0.0
    %1126 = vmatpush1.msra.mxu0 0.0
    %1127 = vmatprep.subr.mxu0 0.0
    %1128 = vmatpush1.msra.mxu0 0.0
    %1129 = vmatprep.subr.mxu0 0.0
    %1130 = vmatpush1.msra.mxu0 0.0
    %1131 = vmatprep.subr.mxu0 0.0
    %1132 = vmatpush1.msra.mxu0 0.0
    %1133 = vmatprep.subr.mxu0 0.0
    %1134 = vmatpush1.msra.mxu0 0.0
    %1135 = vmatprep.subr.mxu0 0.0
    %1136 = vmatpush1.msra.mxu0 0.0
    %1137 = vmatprep.subr.mxu0 0.0
    %1138 = vmatpush1.msra.mxu0 0.0
    %1139 = vmatprep.subr.mxu0 0.0
    %1140 = vmatpush1.msra.mxu0 0.0
    %1141 = vmatprep.subr.mxu0 0.0
    %1142 = vmatpush1.msra.mxu0 0.0
    %1143 = vmatprep.subr.mxu0 0.0
    %1144 = vmatpush1.msra.mxu0 0.0
    %1145 = vmatprep.subr.mxu0 0.0
    %1146 = vmatpush1.msra.mxu0 0.0
    %1147 = vmatprep.subr.mxu0 0.0
    %1148 = vmatpush1.msra.mxu0 0.0
    %1149 = vmatprep.subr.mxu0 0.0
    %1150 = vmatpush1.msra.mxu0 0.0
    %1151 = vmatprep.subr.mxu0 0.0
    %1152 = vmatpush1.msra.mxu0 0.0
    %1153 = vmatprep.subr.mxu0 0.0
    %1154 = vmatpush1.msra.mxu0 0.0
    %1155 = vmatprep.subr.mxu0 0.0
    %1156 = vmatpush1.msra.mxu0 0.0
    %1157 = vmatprep.subr.mxu0 0.0
    %1158 = vmatpush1.msra.mxu0 0.0
    %1159 = vmatprep.subr.mxu0 0.0
    %1160 = vmatpush1.msra.mxu0 0.0
    %1161 = vmatprep.subr.mxu0 0.0
    %1162 = vmatpush1.msra.mxu0 0.0
    %1163 = vmatprep.subr.mxu0 0.0
    %1164 = vmatpush1.msra.mxu0 0.0
    %1165 = vmatprep.subr.mxu0 0.0
    %1166 = vmatpush1.msra.mxu0 0.0
    %1167 = vmatprep.subr.mxu0 0.0
    %1168 = vmatpush1.msra.mxu0 0.0
    %1169 = vmatprep.subr.mxu0 0.0
    %1170 = vmatpush1.msra.mxu0 0.0
    %1171 = vmatprep.subr.mxu0 0.0
    %1172 = vmatpush1.msra.mxu0 0.0
    %1173 = vmatprep.subr.mxu0 0.0
    %1174 = vmatpush1.msra.mxu0 0.0
    %1175 = vmatprep.subr.mxu0 0.0
    %1176 = vmatpush1.msra.mxu0 0.0
    %1177 = vmatprep.subr.mxu0 0.0
    %1178 = vmatpush1.msra.mxu0 0.0
    %1179 = vmatprep.subr.mxu0 0.0
    %1180 = vmatpush1.msra.mxu0 0.0
    %1181 = vmatprep.subr.mxu0 0.0
    %1182 = vmatpush1.msra.mxu0 0.0
    %1183 = vmatprep.subr.mxu0 0.0
    %1184 = vmatpush1.msra.mxu0 0.0
    %1185 = vmatprep.subr.mxu0 0.0
    %1186 = vmatpush1.msra.mxu0 0.0
    %1187 = vmatprep.mubr.f32.mxu0 0.0
    %v1188 = vand.u32 %v1023, 4294901760
    %1189 = vmatmul.mubr.f32.gmra.mrb[0].mxu0 %v1188
    %v1190 = vpop.f32.mrb[0].mxu0
    %v1191 = vadd.f32 %v1105, %v1190
    %v1192 = vpop.f32.mrb[0].mxu0
    %1193 = vmatprep.mubr.f32.mxu0 0.0
    %v1194 = vand.u32 %v1026, 4294901760
    %1195 = vmatmul.mubr.f32.gmra.mrb[0].mxu0 %v1194
    %v1196 = vpop.f32.mrb[0].mxu0
    %v1197 = vadd.f32 %v1115, %v1196
    %v1198 = vpop.f32.mrb[0].mxu0
    %1199 = vdwg.mxu0
    %1200 = vmatprep.subr.mxu0 0.0
    %v1201 = vand.u32 %v1030, 4294901760
    %v1202 = vsub.f32 %v1030, %v1201
    %1203 = vmatpush1.msra.mxu0 %v1202
    %1204 = vmatprep.subr.mxu0 0.0
    %1205 = vmatpush1.msra.mxu0 0.0
    %1206 = vmatprep.subr.mxu0 0.0
    %1207 = vmatpush1.msra.mxu0 0.0
    %1208 = vmatprep.subr.mxu0 0.0
    %1209 = vmatpush1.msra.mxu0 0.0
    %1210 = vmatprep.subr.mxu0 0.0
    %1211 = vmatpush1.msra.mxu0 0.0
    %1212 = vmatprep.subr.mxu0 0.0
    %1213 = vmatpush1.msra.mxu0 0.0
    %1214 = vmatprep.subr.mxu0 0.0
    %1215 = vmatpush1.msra.mxu0 0.0
    %1216 = vmatprep.subr.mxu0 0.0
    %1217 = vmatpush1.msra.mxu0 0.0
    %1218 = vmatprep.subr.mxu0 0.0
    %1219 = vmatpush1.msra.mxu0 0.0
    %1220 = vmatprep.subr.mxu0 0.0
    %1221 = vmatpush1.msra.mxu0 0.0
    %1222 = vmatprep.subr.mxu0 0.0
    %1223 = vmatpush1.msra.mxu0 0.0
    %1224 = vmatprep.subr.mxu0 0.0
    %1225 = vmatpush1.msra.mxu0 0.0
    %1226 = vmatprep.subr.mxu0 0.0
    %1227 = vmatpush1.msra.mxu0 0.0
    %1228 = vmatprep.subr.mxu0 0.0
    %1229 = vmatpush1.msra.mxu0 0.0
    %1230 = vmatprep.subr.mxu0 0.0
    %1231 = vmatpush1.msra.mxu0 0.0
    %1232 = vmatprep.subr.mxu0 0.0
    %1233 = vmatpush1.msra.mxu0 0.0
    %1234 = vmatprep.subr.mxu0 0.0
    %1235 = vmatpush1.msra.mxu0 0.0
    %1236 = vmatprep.subr.mxu0 0.0
    %1237 = vmatpush1.msra.mxu0 0.0
    %1238 = vmatprep.subr.mxu0 0.0
    %1239 = vmatpush1.msra.mxu0 0.0
    %1240 = vmatprep.subr.mxu0 0.0
    %1241 = vmatpush1.msra.mxu0 0.0
    %1242 = vmatprep.subr.mxu0 0.0
    %1243 = vmatpush1.msra.mxu0 0.0
    %1244 = vmatprep.subr.mxu0 0.0
    %1245 = vmatpush1.msra.mxu0 0.0
    %1246 = vmatprep.subr.mxu0 0.0
    %1247 = vmatpush1.msra.mxu0 0.0
    %1248 = vmatprep.subr.mxu0 0.0
    %1249 = vmatpush1.msra.mxu0 0.0
    %1250 = vmatprep.subr.mxu0 0.0
    %1251 = vmatpush1.msra.mxu0 0.0
    %1252 = vmatprep.subr.mxu0 0.0
    %1253 = vmatpush1.msra.mxu0 0.0
    %1254 = vmatprep.subr.mxu0 0.0
    %1255 = vmatpush1.msra.mxu0 0.0
    %1256 = vmatprep.subr.mxu0 0.0
    %1257 = vmatpush1.msra.mxu0 0.0
    %1258 = vmatprep.subr.mxu0 0.0
    %1259 = vmatpush1.msra.mxu0 0.0
    %1260 = vmatprep.subr.mxu0 0.0
    %1261 = vmatpush1.msra.mxu0 0.0
    %1262 = vmatprep.subr.mxu0 0.0
    %1263 = vmatpush1.msra.mxu0 0.0
    %1264 = vmatprep.subr.mxu0 0.0
    %1265 = vmatpush1.msra.mxu0 0.0
    %1266 = vmatprep.mubr.f32.mxu0 0.0
    %v1267 = vand.u32 %v1023, 4294901760
    %v1268 = vsub.f32 %v1023, %v1267
    %1269 = vmatmul.mubr.f32.gmra.mrb[0].mxu0 %v1268
    %v1270 = vpop.f32.mrb[0].mxu0
    %v1271 = vadd.f32 %v1191, %v1270
    %v1272 = vpop.f32.mrb[0].mxu0
    %1273 = vmatprep.mubr.f32.mxu0 0.0
    %v1274 = vand.u32 %v1026, 4294901760
    %v1275 = vsub.f32 %v1026, %v1274
    %1276 = vmatmul.mubr.f32.gmra.mrb[0].mxu0 %v1275
    %v1277 = vpop.f32.mrb[0].mxu0
    %v1278 = vadd.f32 %v1197, %v1277
    %v1279 = vpop.f32.mrb[0].mxu0
    %1280 = vdwg.mxu0
    %1281 = vmatprep.subr.mxu0 0.0
    %v1282 = vand.u32 %v1030, 4294901760
    %1283 = vmatpush1.msra.mxu0 %v1282
    %1284 = vmatprep.subr.mxu0 0.0
    %1285 = vmatpush1.msra.mxu0 0.0
    %1286 = vmatprep.subr.mxu0 0.0
    %1287 = vmatpush1.msra.mxu0 0.0
    %1288 = vmatprep.subr.mxu0 0.0
    %1289 = vmatpush1.msra.mxu0 0.0
    %1290 = vmatprep.subr.mxu0 0.0
    %1291 = vmatpush1.msra.mxu0 0.0
    %1292 = vmatprep.subr.mxu0 0.0
    %1293 = vmatpush1.msra.mxu0 0.0
    %1294 = vmatprep.subr.mxu0 0.0
    %1295 = vmatpush1.msra.mxu0 0.0
    %1296 = vmatprep.subr.mxu0 0.0
    %1297 = vmatpush1.msra.mxu0 0.0
    %1298 = vmatprep.subr.mxu0 0.0
    %1299 = vmatpush1.msra.mxu0 0.0
    %1300 = vmatprep.subr.mxu0 0.0
    %1301 = vmatpush1.msra.mxu0 0.0
    %1302 = vmatprep.subr.mxu0 0.0
    %1303 = vmatpush1.msra.mxu0 0.0
    %1304 = vmatprep.subr.mxu0 0.0
    %1305 = vmatpush1.msra.mxu0 0.0
    %1306 = vmatprep.subr.mxu0 0.0
    %1307 = vmatpush1.msra.mxu0 0.0
    %1308 = vmatprep.subr.mxu0 0.0
    %1309 = vmatpush1.msra.mxu0 0.0
    %1310 = vmatprep.subr.mxu0 0.0
    %1311 = vmatpush1.msra.mxu0 0.0
    %1312 = vmatprep.subr.mxu0 0.0
    %1313 = vmatpush1.msra.mxu0 0.0
    %1314 = vmatprep.subr.mxu0 0.0
    %1315 = vmatpush1.msra.mxu0 0.0
    %1316 = vmatprep.subr.mxu0 0.0
    %1317 = vmatpush1.msra.mxu0 0.0
    %1318 = vmatprep.subr.mxu0 0.0
    %1319 = vmatpush1.msra.mxu0 0.0
    %1320 = vmatprep.subr.mxu0 0.0
    %1321 = vmatpush1.msra.mxu0 0.0
    %1322 = vmatprep.subr.mxu0 0.0
    %1323 = vmatpush1.msra.mxu0 0.0
    %1324 = vmatprep.subr.mxu0 0.0
    %1325 = vmatpush1.msra.mxu0 0.0
    %1326 = vmatprep.subr.mxu0 0.0
    %1327 = vmatpush1.msra.mxu0 0.0
    %1328 = vmatprep.subr.mxu0 0.0
    %1329 = vmatpush1.msra.mxu0 0.0
    %1330 = vmatprep.subr.mxu0 0.0
    %1331 = vmatpush1.msra.mxu0 0.0
    %1332 = vmatprep.subr.mxu0 0.0
    %1333 = vmatpush1.msra.mxu0 0.0
    %1334 = vmatprep.subr.mxu0 0.0
    %1335 = vmatpush1.msra.mxu0 0.0
    %1336 = vmatprep.subr.mxu0 0.0
    %1337 = vmatpush1.msra.mxu0 0.0
    %1338 = vmatprep.subr.mxu0 0.0
    %1339 = vmatpush1.msra.mxu0 0.0
    %1340 = vmatprep.subr.mxu0 0.0
    %1341 = vmatpush1.msra.mxu0 0.0
    %1342 = vmatprep.subr.mxu0 0.0
    %1343 = vmatpush1.msra.mxu0 0.0
    %1344 = vmatprep.subr.mxu0 0.0
    %1345 = vmatpush1.msra.mxu0 0.0
    %1346 = vmatprep.mubr.f32.mxu0 0.0
    %v1347 = vand.u32 %v1023, 4294901760
    %v1348 = vsub.f32 %v1023, %v1347
    %v1349 = vand.u32 %v1348, 4294901760
    %1350 = vmatmul.mubr.f32.gmra.mrb[0].mxu0 %v1349
    %v1351 = vpop.f32.mrb[0].mxu0
    %v1352 = vadd.f32 %v1271, %v1351
    %v1353 = vpop.f32.mrb[0].mxu0
    %1354 = vmatprep.mubr.f32.mxu0 0.0
    %v1355 = vand.u32 %v1026, 4294901760
    %v1356 = vsub.f32 %v1026, %v1355
    %v1357 = vand.u32 %v1356, 4294901760
    %1358 = vmatmul.mubr.f32.gmra.mrb[0].mxu0 %v1357
    %v1359 = vpop.f32.mrb[0].mxu0
    %v1360 = vadd.f32 %v1278, %v1359
    %v1361 = vpop.f32.mrb[0].mxu0
    %1362 = vdwg.mxu0
    %1363 = vmatprep.subr.mxu0 0.0
    %v1364 = vand.u32 %v1030, 4294901760
    %v1365 = vsub.f32 %v1030, %v1364
    %v1366 = vand.u32 %v1365, 4294901760
    %1367 = vmatpush1.msra.mxu0 %v1366
    %1368 = vmatprep.subr.mxu0 0.0
    %1369 = vmatpush1.msra.mxu0 0.0
    %1370 = vmatprep.subr.mxu0 0.0
    %1371 = vmatpush1.msra.mxu0 0.0
    %1372 = vmatprep.subr.mxu0 0.0
    %1373 = vmatpush1.msra.mxu0 0.0
    %1374 = vmatprep.subr.mxu0 0.0
    %1375 = vmatpush1.msra.mxu0 0.0
    %1376 = vmatprep.subr.mxu0 0.0
    %1377 = vmatpush1.msra.mxu0 0.0
    %1378 = vmatprep.subr.mxu0 0.0
    %1379 = vmatpush1.msra.mxu0 0.0
    %1380 = vmatprep.subr.mxu0 0.0
    %1381 = vmatpush1.msra.mxu0 0.0
    %1382 = vmatprep.subr.mxu0 0.0
    %1383 = vmatpush1.msra.mxu0 0.0
    %1384 = vmatprep.subr.mxu0 0.0
    %1385 = vmatpush1.msra.mxu0 0.0
    %1386 = vmatprep.subr.mxu0 0.0
    %1387 = vmatpush1.msra.mxu0 0.0
    %1388 = vmatprep.subr.mxu0 0.0
    %1389 = vmatpush1.msra.mxu0 0.0
    %1390 = vmatprep.subr.mxu0 0.0
    %1391 = vmatpush1.msra.mxu0 0.0
    %1392 = vmatprep.subr.mxu0 0.0
    %1393 = vmatpush1.msra.mxu0 0.0
    %1394 = vmatprep.subr.mxu0 0.0
    %1395 = vmatpush1.msra.mxu0 0.0
    %1396 = vmatprep.subr.mxu0 0.0
    %1397 = vmatpush1.msra.mxu0 0.0
    %1398 = vmatprep.subr.mxu0 0.0
    %1399 = vmatpush1.msra.mxu0 0.0
    %1400 = vmatprep.subr.mxu0 0.0
    %1401 = vmatpush1.msra.mxu0 0.0
    %1402 = vmatprep.subr.mxu0 0.0
    %1403 = vmatpush1.msra.mxu0 0.0
    %1404 = vmatprep.subr.mxu0 0.0
    %1405 = vmatpush1.msra.mxu0 0.0
    %1406 = vmatprep.subr.mxu0 0.0
    %1407 = vmatpush1.msra.mxu0 0.0
    %1408 = vmatprep.subr.mxu0 0.0
    %1409 = vmatpush1.msra.mxu0 0.0
    %1410 = vmatprep.subr.mxu0 0.0
    %1411 = vmatpush1.msra.mxu0 0.0
    %1412 = vmatprep.subr.mxu0 0.0
    %1413 = vmatpush1.msra.mxu0 0.0
    %1414 = vmatprep.subr.mxu0 0.0
    %1415 = vmatpush1.msra.mxu0 0.0
    %1416 = vmatprep.subr.mxu0 0.0
    %1417 = vmatpush1.msra.mxu0 0.0
    %1418 = vmatprep.subr.mxu0 0.0
    %1419 = vmatpush1.msra.mxu0 0.0
    %1420 = vmatprep.subr.mxu0 0.0
    %1421 = vmatpush1.msra.mxu0 0.0
    %1422 = vmatprep.subr.mxu0 0.0
    %1423 = vmatpush1.msra.mxu0 0.0
    %1424 = vmatprep.subr.mxu0 0.0
    %1425 = vmatpush1.msra.mxu0 0.0
    %1426 = vmatprep.subr.mxu0 0.0
    %1427 = vmatpush1.msra.mxu0 0.0
    %1428 = vmatprep.subr.mxu0 0.0
    %1429 = vmatpush1.msra.mxu0 0.0
    %1430 = vmatprep.mubr.f32.mxu0 0.0
    %v1431 = vand.u32 %v1023, 4294901760
    %1432 = vmatmul.mubr.f32.gmra.mrb[0].mxu0 %v1431
    %v1433 = vpop.f32.mrb[0].mxu0
    %v1434 = vadd.f32 %v1352, %v1433
    %v1435 = vpop.f32.mrb[0].mxu0
    %1436 = vmatprep.mubr.f32.mxu0 0.0
    %v1437 = vand.u32 %v1026, 4294901760
    %1438 = vmatmul.mubr.f32.gmra.mrb[0].mxu0 %v1437
    %v1439 = vpop.f32.mrb[0].mxu0
    %v1440 = vadd.f32 %v1360, %v1439
    %v1441 = vpop.f32.mrb[0].mxu0
    %1442 = vdwg.mxu0
    %1443 = vmatprep.subr.mxu0 0.0
    %v1444 = vand.u32 %v1030, 4294901760
    %1445 = vmatpush1.msra.mxu0 %v1444
    %1446 = vmatprep.subr.mxu0 0.0
    %1447 = vmatpush1.msra.mxu0 0.0
    %1448 = vmatprep.subr.mxu0 0.0
    %1449 = vmatpush1.msra.mxu0 0.0
    %1450 = vmatprep.subr.mxu0 0.0
    %1451 = vmatpush1.msra.mxu0 0.0
    %1452 = vmatprep.subr.mxu0 0.0
    %1453 = vmatpush1.msra.mxu0 0.0
    %1454 = vmatprep.subr.mxu0 0.0
    %1455 = vmatpush1.msra.mxu0 0.0
    %1456 = vmatprep.subr.mxu0 0.0
    %1457 = vmatpush1.msra.mxu0 0.0
    %1458 = vmatprep.subr.mxu0 0.0
    %1459 = vmatpush1.msra.mxu0 0.0
    %1460 = vmatprep.subr.mxu0 0.0
    %1461 = vmatpush1.msra.mxu0 0.0
    %1462 = vmatprep.subr.mxu0 0.0
    %1463 = vmatpush1.msra.mxu0 0.0
    %1464 = vmatprep.subr.mxu0 0.0
    %1465 = vmatpush1.msra.mxu0 0.0
    %1466 = vmatprep.subr.mxu0 0.0
    %1467 = vmatpush1.msra.mxu0 0.0
    %1468 = vmatprep.subr.mxu0 0.0
    %1469 = vmatpush1.msra.mxu0 0.0
    %1470 = vmatprep.subr.mxu0 0.0
    %1471 = vmatpush1.msra.mxu0 0.0
    %1472 = vmatprep.subr.mxu0 0.0
    %1473 = vmatpush1.msra.mxu0 0.0
    %1474 = vmatprep.subr.mxu0 0.0
    %1475 = vmatpush1.msra.mxu0 0.0
    %1476 = vmatprep.subr.mxu0 0.0
    %1477 = vmatpush1.msra.mxu0 0.0
    %1478 = vmatprep.subr.mxu0 0.0
    %1479 = vmatpush1.msra.mxu0 0.0
    %1480 = vmatprep.subr.mxu0 0.0
    %1481 = vmatpush1.msra.mxu0 0.0
    %1482 = vmatprep.subr.mxu0 0.0
    %1483 = vmatpush1.msra.mxu0 0.0
    %1484 = vmatprep.subr.mxu0 0.0
    %1485 = vmatpush1.msra.mxu0 0.0
    %1486 = vmatprep.subr.mxu0 0.0
    %1487 = vmatpush1.msra.mxu0 0.0
    %1488 = vmatprep.subr.mxu0 0.0
    %1489 = vmatpush1.msra.mxu0 0.0
    %1490 = vmatprep.subr.mxu0 0.0
    %1491 = vmatpush1.msra.mxu0 0.0
    %1492 = vmatprep.subr.mxu0 0.0
    %1493 = vmatpush1.msra.mxu0 0.0
    %1494 = vmatprep.subr.mxu0 0.0
    %1495 = vmatpush1.msra.mxu0 0.0
    %1496 = vmatprep.subr.mxu0 0.0
    %1497 = vmatpush1.msra.mxu0 0.0
    %1498 = vmatprep.subr.mxu0 0.0
    %1499 = vmatpush1.msra.mxu0 0.0
    %1500 = vmatprep.subr.mxu0 0.0
    %1501 = vmatpush1.msra.mxu0 0.0
    %1502 = vmatprep.subr.mxu0 0.0
    %1503 = vmatpush1.msra.mxu0 0.0
    %1504 = vmatprep.subr.mxu0 0.0
    %1505 = vmatpush1.msra.mxu0 0.0
    %1506 = vmatprep.subr.mxu0 0.0
    %1507 = vmatpush1.msra.mxu0 0.0
    %1508 = vmatprep.mubr.f32.mxu0 0.0
    %v1509 = vand.u32 %v1023, 4294901760
    %1510 = vmatmul.mubr.f32.gmra.mrb[0].mxu0 %v1509
    %v1511 = vpop.f32.mrb[0].mxu0
    %v1512 = vadd.f32 %v1434, %v1511
    %v1513 = vpop.f32.mrb[0].mxu0
    %1514 = vmatprep.mubr.f32.mxu0 0.0
    %v1515 = vand.u32 %v1026, 4294901760
    %1516 = vmatmul.mubr.f32.gmra.mrb[0].mxu0 %v1515
    %v1517 = vpop.f32.mrb[0].mxu0
    %v1518 = vadd.f32 %v1440, %v1517
    %v1519 = vpop.f32.mrb[0].mxu0
    %1520 = vdwg.mxu0
    %v1521 = vmul.f32 %v1512, %v155
    %v1522 = vmul.f32 %v1518, %v161
    %v1523 = vrot.slane %v1521, 4
    %v1524 = vadd.f32 %v1521, %v1523
    %v1525 = vrot.slane %v1524, 2
    %v1526 = vadd.f32 %v1524, %v1525
    %v1527 = vrot.slane %v1526, 1
    %v1528 = vadd.f32 %v1526, %v1527
    %v1529 = vrot.slane %v1522, 4
    %v1530 = vadd.f32 %v1522, %v1529
    %v1531 = vrot.slane %v1530, 2
    %v1532 = vadd.f32 %v1530, %v1531
    %v1533 = vrot.slane %v1532, 1
    %v1534 = vadd.f32 %v1532, %v1533
    %v1535 = vld [vmem:[%s4] sm:$0xff]
    %v1536 = vld [vmem:[%s4 + $0x8] sm:$0xff]
    %v1537 = vld [vmem:[%s4 + $0x10] sm:$0xff]
    %v1538 = vld [vmem:[%s4 + $0x18] sm:$0xff]
    %v1539 = vld [vmem:[%s4 + $0x20] sm:$0xff]
    %v1540 = vld [vmem:[%s4 + $0x28] sm:$0xff]
    %v1541 = vld [vmem:[%s4 + $0x30] sm:$0xff]
    %v1542 = vld [vmem:[%s4 + $0x38] sm:$0xff]
    %v1543 = vld [vmem:[%s4 + $0x40] sm:$0xff]
    %v1544 = vld [vmem:[%s4 + $0x48] sm:$0xff]
    %v1545 = vld [vmem:[%s4 + $0x50] sm:$0xff]
    %v1546 = vld [vmem:[%s4 + $0x58] sm:$0xff]
    %v1547 = vld [vmem:[%s4 + $0x60] sm:$0xff]
    %v1548 = vld [vmem:[%s4 + $0x68] sm:$0xff]
    %v1549 = vld [vmem:[%s4 + $0x70] sm:$0xff]
    %v1550 = vld [vmem:[%s4 + $0x78] sm:$0xff]
    %v1551 = vld [vmem:[#allocation7] sm:$0x1]
    %v1553 = vlaneseq
    %v1554 = vshrl.u32 %v1553, 7
    %v1555 = vsub.s32 0, %v1554
    %v1556 = vrot.slane %v1551, %v1555
    %vm1560 = vcmask 1041409
    %v1561 = vsel %vm1560, %v1534, %v1528
    %1563 = vmatprep.subr.mxu0 0.0
    %1564 = vmatpush1.msra.mxu0 %v1535
    %1565 = vmatprep.subr.mxu0 0.0
    %1566 = vmatpush1.msra.mxu0 %v1536
    %1567 = vmatprep.subr.mxu0 0.0
    %1568 = vmatpush1.msra.mxu0 %v1537
    %1569 = vmatprep.subr.mxu0 0.0
    %1570 = vmatpush1.msra.mxu0 %v1538
    %1571 = vmatprep.subr.mxu0 0.0
    %1572 = vmatpush1.msra.mxu0 %v1539
    %1573 = vmatprep.subr.mxu0 0.0
    %1574 = vmatpush1.msra.mxu0 %v1540
    %1575 = vmatprep.subr.mxu0 0.0
    %1576 = vmatpush1.msra.mxu0 %v1541
    %1577 = vmatprep.subr.mxu0 0.0
    %1578 = vmatpush1.msra.mxu0 %v1542
    %1579 = vmatprep.subr.mxu0 0.0
    %1580 = vmatpush1.msra.mxu0 %v1543
    %1581 = vmatprep.subr.mxu0 0.0
    %1582 = vmatpush1.msra.mxu0 %v1544
    %1583 = vmatprep.subr.mxu0 0.0
    %1584 = vmatpush1.msra.mxu0 %v1545
    %1585 = vmatprep.subr.mxu0 0.0
    %1586 = vmatpush1.msra.mxu0 %v1546
    %1587 = vmatprep.subr.mxu0 0.0
    %1588 = vmatpush1.msra.mxu0 %v1547
    %1589 = vmatprep.subr.mxu0 0.0
    %1590 = vmatpush1.msra.mxu0 %v1548
    %1591 = vmatprep.subr.mxu0 0.0
    %1592 = vmatpush1.msra.mxu0 %v1549
    %1593 = vmatprep.subr.mxu0 0.0
    %1594 = vmatpush1.msra.mxu0 %v1550
    %1595 = vmatprep.subr.mxu0 0.0
    %1596 = vmatpush1.msra.mxu0 0.0
    %1597 = vmatprep.subr.mxu0 0.0
    %1598 = vmatpush1.msra.mxu0 0.0
    %1599 = vmatprep.subr.mxu0 0.0
    %1600 = vmatpush1.msra.mxu0 0.0
    %1601 = vmatprep.subr.mxu0 0.0
    %1602 = vmatpush1.msra.mxu0 0.0
    %1603 = vmatprep.subr.mxu0 0.0
    %1604 = vmatpush1.msra.mxu0 0.0
    %1605 = vmatprep.subr.mxu0 0.0
    %1606 = vmatpush1.msra.mxu0 0.0
    %1607 = vmatprep.subr.mxu0 0.0
    %1608 = vmatpush1.msra.mxu0 0.0
    %1609 = vmatprep.subr.mxu0 0.0
    %1610 = vmatpush1.msra.mxu0 0.0
    %1611 = vmatprep.subr.mxu0 0.0
    %1612 = vmatpush1.msra.mxu0 0.0
    %1613 = vmatprep.subr.mxu0 0.0
    %1614 = vmatpush1.msra.mxu0 0.0
    %1615 = vmatprep.subr.mxu0 0.0
    %1616 = vmatpush1.msra.mxu0 0.0
    %1617 = vmatprep.subr.mxu0 0.0
    %1618 = vmatpush1.msra.mxu0 0.0
    %1619 = vmatprep.subr.mxu0 0.0
    %1620 = vmatpush1.msra.mxu0 0.0
    %1621 = vmatprep.subr.mxu0 0.0
    %1622 = vmatpush1.msra.mxu0 0.0
    %1623 = vmatprep.subr.mxu0 0.0
    %1624 = vmatpush1.msra.mxu0 0.0
    %1625 = vmatprep.subr.mxu0 0.0
    %1626 = vmatpush1.msra.mxu0 0.0
    %1627 = vmatprep.mubr.f32.mxu0 0.0
    %1628 = vmatmul.mubr.f32.gmra.mrb[0].mxu0 %v1561
    %v1629 = vpop.f32.mrb[0].mxu0
    %v1630 = vadd.f32 %v1556, %v1629
    %v1631 = vpop.f32.mrb[0].mxu0
    %1632 = vdwg.mxu0
    %1633 = vst [vmem:[#allocation8] sm:$0x3] %v1630
    // Predicated region
    $region46: #{tpu_custom_call.1} parent=1 // pred_check
      _
    $region47: #{tpu_custom_call.1} parent=1 // pred_check_branch
      %1635 = sbr.rel (0) target = $region49
    $region48: #{tpu_custom_call.1} parent=1 // pred_region
      %s1637 = ssub.s32 32, 32
      %1638 = vsyncadd [#allocation4], %s1637
      %s1640 = sshll.u32 [#allocation8], 4
      %s1641 = int_to_ptr.vmem [resolvable:$true] %s1640
      %1643 = dma.vmem_to_hbm [thread:$0]  %s1641, 32, %s8, [#allocation4]
    $region49: #{tpu_custom_call.1} parent=1 // pred_fallthru
      _
    // Predicated region
    $region50: #{tpu_custom_call.1} parent=1 // pred_check
      _
    $region51: #{tpu_custom_call.1} parent=1 // pred_check_branch
      %1645 = sbr.rel (0) target = $region53
    $region52: #{tpu_custom_call.1} parent=1 // pred_region
      %1646 = dma.done [#allocation4], 32
    $region53: #{tpu_custom_call.1} parent=1 // pred_fallthru
      _
    %1647 = vsyncpa [#allocation3], 1
    %1648 = vsyncpa [#allocation6], 1
    %1649 = vsyncpa [#allocation4], 1

// kernel: tpu_custom_call.1
$region0: #{tpu_custom_call.1}
  #allocation0 [shape = 'u32[]', space=smem, size = 0x4, offset = 0x4, fixed_abs, tag = 'smem constant byte address 0x4 - core index']
  #allocation1 [shape = 'u32[144,128]{1,0:T(1,128)}', space=vmem, size = 0x12000, scoped, tag = 'internal scratch']
  %s0 = inlined_call_operand.vmem [shape: f32[16,32], index: 0, kind: input, shape index: {}]
  %s1 = inlined_call_operand.vmem [shape: f32[2,32], index: 1, kind: input, shape index: {}]
  %s2 = inlined_call_operand.hbm [shape: f32[32,128], index: 2, kind: input, shape index: {}]
  %s3 = inlined_call_operand.hbm [shape: f32[32,256], index: 3, kind: input, shape index: {}]
  %s4 = inlined_call_operand.vmem [shape: f32[128,128], index: 4, kind: input, shape index: {}]
  %s5 = inlined_call_operand.hbm [shape: f32[1,128], index: 5, kind: input, shape index: {}]
  %s6 = inlined_call_operand.vmem [shape: f32[128,4], index: 6, kind: input, shape index: {}]
  %s7 = inlined_call_operand.vmem [shape: f32[4,128], index: 7, kind: input, shape index: {}]
  %s8 = inlined_call_operand.hbm [shape: f32[2,128], index: 8, kind: output, shape index: {}]
  %s9 = sld [smem:[#allocation0]]
  $region54: #{tpu_custom_call.1} parent=0
    _
  %s11 = ssub.s32 1, %s9
  %s12 = scalar_select 0, %s11, %s9
  $region1: #{tpu_custom_call.1} parent=0
    #allocation2 [shape = 'u8[16384]{0}', space=vmem, size = 0x4000, scoped, tag = 'input window, operand 2, single buffered']
    #allocation3 [shape = 's32[1]{0}', space=sflag, size = 0x4, scoped, tag = 'scoped memory for tpu_custom_call.1']
    #allocation4 [shape = 's32[1]{0}', space=sflag, size = 0x4, scoped, tag = 'scoped memory for tpu_custom_call.1']
    #allocation5 [shape = 'u8[32768]{0}', space=vmem, size = 0x8000, scoped, tag = 'input window, operand 3, single buffered']
    #allocation6 [shape = 's32[1]{0}', space=sflag, size = 0x4, scoped, tag = 'scoped memory for tpu_custom_call.1']
    #allocation7 [shape = 'u8[512]{0}', space=vmem, size = 0x400, scoped, tag = 'input window, operand 5, single buffered']
    #allocation8 [shape = 'u8[1024]{0}', space=vmem, size = 0x400, scoped, tag = 'output window, operand 0, single buffered']
    %13 = vsyncpa [#allocation3], 0
    %14 = vsyncpa [#allocation6], 0
    %15 = vsyncpa [#allocation4], 0
    // Predicated region
    $region2: #{tpu_custom_call.1} parent=1 // pred_check
      _
    $region3: #{tpu_custom_call.1} parent=1 // pred_check_branch
      %17 = sbr.rel (0) target = $region5
    $region4: #{tpu_custom_call.1} parent=1 // pred_region
      _
    $region5: #{tpu_custom_call.1} parent=1 // pred_fallthru
      _
    // Predicated region
    $region6: #{tpu_custom_call.1} parent=1 // pred_check
      _
    $region7: #{tpu_custom_call.1} parent=1 // pred_check_branch
      %19 = sbr.rel (0) target = $region9
    $region8: #{tpu_custom_call.1} parent=1 // pred_region
      _
    $region9: #{tpu_custom_call.1} parent=1 // pred_fallthru
      _
    // Predicated region
    $region10: #{tpu_custom_call.1} parent=1 // pred_check
      _
    $region11: #{tpu_custom_call.1} parent=1 // pred_check_branch
      %21 = sbr.rel (0) target = $region13
    $region12: #{tpu_custom_call.1} parent=1 // pred_region
      %s23 = ssub.s32 512, 512
      %24 = vsyncadd [#allocation3], %s23
      %s25 = sshll.u32 [#allocation2], 4
      %s26 = int_to_ptr.vmem [resolvable:$true] %s25
      %31 = dma.hbm_to_vmem [thread:$0]  %s2, 512, %s26, [#allocation3], 128, 128, 8
    $region13: #{tpu_custom_call.1} parent=1 // pred_fallthru
      _
    // Predicated region
    $region14: #{tpu_custom_call.1} parent=1 // pred_check
      _
    $region15: #{tpu_custom_call.1} parent=1 // pred_check_branch
      %33 = sbr.rel (0) target = $region17
    $region16: #{tpu_custom_call.1} parent=1 // pred_region
      %s35 = ssub.s32 1024, 1024
      %36 = vsyncadd [#allocation6], %s35
      %s37 = sshll.u32 [#allocation5], 4
      %s38 = int_to_ptr.vmem [resolvable:$true] %s37
      %43 = dma.hbm_to_vmem [thread:$0]  %s3, 1024, %s38, [#allocation6], 256, 256, 16
    $region17: #{tpu_custom_call.1} parent=1 // pred_fallthru
      _
    // Predicated region
    $region18: #{tpu_custom_call.1} parent=1 // pred_check
      _
    $region19: #{tpu_custom_call.1} parent=1 // pred_check_branch
      %45 = sbr.rel (0) target = $region21
    $region20: #{tpu_custom_call.1} parent=1 // pred_region
      _
    $region21: #{tpu_custom_call.1} parent=1 // pred_fallthru
      _
    // Predicated region
    $region22: #{tpu_custom_call.1} parent=1 // pred_check
      _
    $region23: #{tpu_custom_call.1} parent=1 // pred_check_branch
      %47 = sbr.rel (0) target = $region25
    $region24: #{tpu_custom_call.1} parent=1 // pred_region
      %s49 = ssub.s32 16, 16
      %50 = vsyncadd [#allocation6], %s49
      %s52 = sshll.u32 [#allocation7], 4
      %s53 = int_to_ptr.vmem [resolvable:$true] %s52
      %55 = dma.hbm_to_vmem [thread:$0]  %s5, 16, %s53, [#allocation6]
    $region25: #{tpu_custom_call.1} parent=1 // pred_fallthru
      _
    // Predicated region
    $region26: #{tpu_custom_call.1} parent=1 // pred_check
      _
    $region27: #{tpu_custom_call.1} parent=1 // pred_check_branch
      %57 = sbr.rel (0) target = $region29
    $region28: #{tpu_custom_call.1} parent=1 // pred_region
      _
    $region29: #{tpu_custom_call.1} parent=1 // pred_fallthru
      _
    // Predicated region
    $region30: #{tpu_custom_call.1} parent=1 // pred_check
      _
    $region31: #{tpu_custom_call.1} parent=1 // pred_check_branch
      %59 = sbr.rel (0) target = $region33
    $region32: #{tpu_custom_call.1} parent=1 // pred_region
      _
    $region33: #{tpu_custom_call.1} parent=1 // pred_fallthru
      _
    // Predicated region
    $region34: #{tpu_custom_call.1} parent=1 // pred_check
      _
    $region35: #{tpu_custom_call.1} parent=1 // pred_check_branch
      %61 = sbr.rel (0) target = $region37
    $region36: #{tpu_custom_call.1} parent=1 // pred_region
      %62 = dma.done [#allocation3], 512
    $region37: #{tpu_custom_call.1} parent=1 // pred_fallthru
      _
    // Predicated region
    $region38: #{tpu_custom_call.1} parent=1 // pred_check
      _
    $region39: #{tpu_custom_call.1} parent=1 // pred_check_branch
      %64 = sbr.rel (0) target = $region41
    $region40: #{tpu_custom_call.1} parent=1 // pred_region
      %65 = dma.done [#allocation6], 1024
    $region41: #{tpu_custom_call.1} parent=1 // pred_fallthru
      _
    // Predicated region
    $region42: #{tpu_custom_call.1} parent=1 // pred_check
      _
    $region43: #{tpu_custom_call.1} parent=1 // pred_check_branch
      %67 = sbr.rel (0) target = $region45
    $region44: #{tpu_custom_call.1} parent=1 // pred_region
      %68 = dma.done [#allocation6], 16
    $region45: #{tpu_custom_call.1} parent=1 // pred_fallthru
      _
    %v69 = vld [vmem:[%s0] sm:$0xff]
    %v70 = vld [vmem:[%s0 + $0x8] sm:$0xff]
    %v71 = vld [vmem:[#allocation5] sm:$0xff]
    %v72 = vld [vmem:[#allocation5 + $0x8] sm:$0xff]
    %v73 = vld [vmem:[#allocation5 + $0x10] sm:$0xff]
    %v74 = vld [vmem:[#allocation5 + $0x18] sm:$0xff]
    %v75 = vld [vmem:[#allocation5 + $0x20] sm:$0xff]
    %v76 = vld [vmem:[#allocation5 + $0x28] sm:$0xff]
    %v77 = vld [vmem:[#allocation5 + $0x30] sm:$0xff]
    %v78 = vld [vmem:[#allocation5 + $0x38] sm:$0xff]
    %vm79 = vcmask 261120
    %v81 = vsel %vm79, %v69, 0
    %v84 = vsel %vm79, %v70, 0
    %86 = vmatprep.subr.mxu0 %v72
    %87 = vmatpush1.msra.mxu0 %v71
    %88 = vmatprep.subr.mxu0 %v74
    %89 = vmatpush1.msra.mxu0 %v73
    %90 = vmatprep.subr.mxu0 %v76
    %91 = vmatpush1.msra.mxu0 %v75
    %92 = vmatprep.subr.mxu0 %v78
    %93 = vmatpush1.msra.mxu0 %v77
    %94 = vmatprep.subr.mxu0 0.0
    %95 = vmatpush1.msra.mxu0 0.0
    %96 = vmatprep.subr.mxu0 0.0
    %97 = vmatpush1.msra.mxu0 0.0
    %98 = vmatprep.subr.mxu0 0.0
    %99 = vmatpush1.msra.mxu0 0.0
    %100 = vmatprep.subr.mxu0 0.0
    %101 = vmatpush1.msra.mxu0 0.0
    %102 = vmatprep.subr.mxu0 0.0
    %103 = vmatpush1.msra.mxu0 0.0
    %104 = vmatprep.subr.mxu0 0.0
    %105 = vmatpush1.msra.mxu0 0.0
    %106 = vmatprep.subr.mxu0 0.0
    %107 = vmatpush1.msra.mxu0 0.0
    %108 = vmatprep.subr.mxu0 0.0
    %109 = vmatpush1.msra.mxu0 0.0
    %110 = vmatprep.subr.mxu0 0.0
    %111 = vmatpush1.msra.mxu0 0.0
    %112 = vmatprep.subr.mxu0 0.0
    %113 = vmatpush1.msra.mxu0 0.0
    %114 = vmatprep.subr.mxu0 0.0
    %115 = vmatpush1.msra.mxu0 0.0
    %116 = vmatprep.subr.mxu0 0.0
    %117 = vmatpush1.msra.mxu0 0.0
    %118 = vmatprep.subr.mxu0 0.0
    %119 = vmatpush1.msra.mxu0 0.0
    %120 = vmatprep.subr.mxu0 0.0
    %121 = vmatpush1.msra.mxu0 0.0
    %122 = vmatprep.subr.mxu0 0.0
    %123 = vmatpush1.msra.mxu0 0.0
    %124 = vmatprep.subr.mxu0 0.0
    %125 = vmatpush1.msra.mxu0 0.0
    %126 = vmatprep.subr.mxu0 0.0
    %127 = vmatpush1.msra.mxu0 0.0
    %128 = vmatprep.subr.mxu0 0.0
    %129 = vmatpush1.msra.mxu0 0.0
    %130 = vmatprep.subr.mxu0 0.0
    %131 = vmatpush1.msra.mxu0 0.0
    %132 = vmatprep.subr.mxu0 0.0
    %133 = vmatpush1.msra.mxu0 0.0
    %134 = vmatprep.subr.mxu0 0.0
    %135 = vmatpush1.msra.mxu0 0.0
    %136 = vmatprep.subr.mxu0 0.0
    %137 = vmatpush1.msra.mxu0 0.0
    %138 = vmatprep.subr.mxu0 0.0
    %139 = vmatpush1.msra.mxu0 0.0
    %140 = vmatprep.subr.mxu0 0.0
    %141 = vmatpush1.msra.mxu0 0.0
    %142 = vmatprep.subr.mxu0 0.0
    %143 = vmatpush1.msra.mxu0 0.0
    %144 = vmatprep.subr.mxu0 0.0
    %145 = vmatpush1.msra.mxu0 0.0
    %146 = vmatprep.subr.mxu0 0.0
    %147 = vmatpush1.msra.mxu0 0.0
    %148 = vmatprep.subr.mxu0 0.0
    %149 = vmatpush1.msra.mxu0 0.0
    %150 = vmatprep.mubr.f32.mxu0 0.0
    %151 = vmatmul.mubr.f32.gmra.mrb[0].mxu0 %v81
    %v152 = vpop.f32.mrb[0].mxu0
    %v153 = vadd.f32 0.0, %v152
    %v154 = vpop.f32.mrb[0].mxu0
    %v155 = vadd.f32 0.0, %v154
    %156 = vmatprep.mubr.f32.mxu0 0.0
    %157 = vmatmul.mubr.f32.gmra.mrb[0].mxu0 %v84
    %v158 = vpop.f32.mrb[0].mxu0
    %v159 = vadd.f32 0.0, %v158
    %v160 = vpop.f32.mrb[0].mxu0
    %v161 = vadd.f32 0.0, %v160
    %162 = vdwg.mxu0
    %v163 = vld [vmem:[%s1] sm:$0x3]
    %v164 = vld [vmem:[#allocation2] sm:$0xff]
    %v165 = vld [vmem:[#allocation2 + $0x8] sm:$0xff]
    %v166 = vld [vmem:[#allocation2 + $0x10] sm:$0xff]
    %v167 = vld [vmem:[#allocation2 + $0x18] sm:$0xff]
    %v169 = vsel %vm79, %v163, 0
    %171 = vmatprep.subr.mxu0 0.0
    %172 = vmatpush1.msra.mxu0 %v164
    %173 = vmatprep.subr.mxu0 0.0
    %174 = vmatpush1.msra.mxu0 %v165
    %175 = vmatprep.subr.mxu0 0.0
    %176 = vmatpush1.msra.mxu0 %v166
    %177 = vmatprep.subr.mxu0 0.0
    %178 = vmatpush1.msra.mxu0 %v167
    %179 = vmatprep.subr.mxu0 0.0
    %180 = vmatpush1.msra.mxu0 0.0
    %181 = vmatprep.subr.mxu0 0.0
    %182 = vmatpush1.msra.mxu0 0.0
    %183 = vmatprep.subr.mxu0 0.0
    %184 = vmatpush1.msra.mxu0 0.0
    %185 = vmatprep.subr.mxu0 0.0
    %186 = vmatpush1.msra.mxu0 0.0
    %187 = vmatprep.subr.mxu0 0.0
    %188 = vmatpush1.msra.mxu0 0.0
    %189 = vmatprep.subr.mxu0 0.0
    %190 = vmatpush1.msra.mxu0 0.0
    %191 = vmatprep.subr.mxu0 0.0
    %192 = vmatpush1.msra.mxu0 0.0
    %193 = vmatprep.subr.mxu0 0.0
    %194 = vmatpush1.msra.mxu0 0.0
    %195 = vmatprep.subr.mxu0 0.0
    %196 = vmatpush1.msra.mxu0 0.0
    %197 = vmatprep.subr.mxu0 0.0
    %198 = vmatpush1.msra.mxu0 0.0
    %199 = vmatprep.subr.mxu0 0.0
    %200 = vmatpush1.msra.mxu0 0.0
    %201 = vmatprep.subr.mxu0 0.0
    %202 = vmatpush1.msra.mxu0 0.0
    %203 = vmatprep.subr.mxu0 0.0
    %204 = vmatpush1.msra.mxu0 0.0
    %205 = vmatprep.subr.mxu0 0.0
    %206 = vmatpush1.msra.mxu0 0.0
    %207 = vmatprep.subr.mxu0 0.0
    %208 = vmatpush1.msra.mxu0 0.0
    %209 = vmatprep.subr.mxu0 0.0
    %210 = vmatpush1.msra.mxu0 0.0
    %211 = vmatprep.subr.mxu0 0.0
    %212 = vmatpush1.msra.mxu0 0.0
    %213 = vmatprep.subr.mxu0 0.0
    %214 = vmatpush1.msra.mxu0 0.0
    %215 = vmatprep.subr.mxu0 0.0
    %216 = vmatpush1.msra.mxu0 0.0
    %217 = vmatprep.subr.mxu0 0.0
    %218 = vmatpush1.msra.mxu0 0.0
    %219 = vmatprep.subr.mxu0 0.0
    %220 = vmatpush1.msra.mxu0 0.0
    %221 = vmatprep.subr.mxu0 0.0
    %222 = vmatpush1.msra.mxu0 0.0
    %223 = vmatprep.subr.mxu0 0.0
    %224 = vmatpush1.msra.mxu0 0.0
    %225 = vmatprep.subr.mxu0 0.0
    %226 = vmatpush1.msra.mxu0 0.0
    %227 = vmatprep.subr.mxu0 0.0
    %228 = vmatpush1.msra.mxu0 0.0
    %229 = vmatprep.subr.mxu0 0.0
    %230 = vmatpush1.msra.mxu0 0.0
    %231 = vmatprep.subr.mxu0 0.0
    %232 = vmatpush1.msra.mxu0 0.0
    %233 = vmatprep.subr.mxu0 0.0
    %234 = vmatpush1.msra.mxu0 0.0
    %235 = vmatprep.mubr.f32.mxu0 0.0
    %236 = vmatmul.mubr.f32.gmra.mrb[0].mxu0 %v169
    %v237 = vpop.f32.mrb[0].mxu0
    %v238 = vadd.f32 0.0, %v237
    %v239 = vpop.f32.mrb[0].mxu0
    %240 = vdwg.mxu0
    %v243 = vunpack.c.l.s4 1966171168
    %v244 = vunpack.c.0.s8 %v243
    %v245 = vlaneseq
    %v246 = vshrl.u32 %v245, 7
    %v247 = vsub.s32 %v244, %v246
    %v248 = vrot.slane %v238, %v247
    %v249 = vcombine.high %v248, %v248
    %v251 = vunpack.c.l.s4 1966171168
    %v252 = vunpack.c.0.s8 %v251
    %v253 = vlaneseq
    %v254 = vshrl.u32 %v253, 7
    %v255 = vsub.s32 %v252, %v254
    %v256 = vrot.slane %v248, %v255
    %v258 = vunpack.c.l.s4 1966171168
    %v259 = vunpack.c.0.s8 %v258
    %v260 = vlaneseq
    %v261 = vshrl.u32 %v260, 7
    %v262 = vsub.s32 %v259, %v261
    %v263 = vrot.slane %v249, %v262
    %v264 = vlaneseq
    %v265 = vshrl.u32 %v264, 7
    %v266 = vsub.s32 0, %v265
    %v267 = vrot.slane %v256, %v266
    %v268 = vlaneseq
    %v269 = vshrl.u32 %v268, 7
    %v270 = vsub.s32 0, %v269
    %v271 = vrot.slane %v263, %v270
    %v274 = vmul.f32 %v153, %v267
    %v275 = vmul.f32 %v159, %v271
    %v276 = vld [vmem:[%s6] sm:$0xff]
    %v277 = vld [vmem:[%s6 + $0x8] sm:$0xff]
    %v278 = vld [vmem:[%s6 + $0x10] sm:$0xff]
    %v279 = vld [vmem:[%s6 + $0x18] sm:$0xff]
    %v280 = vld [vmem:[%s6 + $0x20] sm:$0xff]
    %v281 = vld [vmem:[%s6 + $0x28] sm:$0xff]
    %v282 = vld [vmem:[%s6 + $0x30] sm:$0xff]
    %v283 = vld [vmem:[%s6 + $0x38] sm:$0xff]
    %v284 = vld [vmem:[%s6 + $0x40] sm:$0xff]
    %v285 = vld [vmem:[%s6 + $0x48] sm:$0xff]
    %v286 = vld [vmem:[%s6 + $0x50] sm:$0xff]
    %v287 = vld [vmem:[%s6 + $0x58] sm:$0xff]
    %v288 = vld [vmem:[%s6 + $0x60] sm:$0xff]
    %v289 = vld [vmem:[%s6 + $0x68] sm:$0xff]
    %v290 = vld [vmem:[%s6 + $0x70] sm:$0xff]
    %v291 = vld [vmem:[%s6 + $0x78] sm:$0xff]
    %292 = vmatprep.subr.mxu0 0.0
    %293 = vmatpush1.msra.mxu0 %v276
    %294 = vmatprep.subr.mxu0 0.0
    %295 = vmatpush1.msra.mxu0 %v277
    %296 = vmatprep.subr.mxu0 0.0
    %297 = vmatpush1.msra.mxu0 %v278
    %298 = vmatprep.subr.mxu0 0.0
    %299 = vmatpush1.msra.mxu0 %v279
    %300 = vmatprep.subr.mxu0 0.0
    %301 = vmatpush1.msra.mxu0 %v280
    %302 = vmatprep.subr.mxu0 0.0
    %303 = vmatpush1.msra.mxu0 %v281
    %304 = vmatprep.subr.mxu0 0.0
    %305 = vmatpush1.msra.mxu0 %v282
    %306 = vmatprep.subr.mxu0 0.0
    %307 = vmatpush1.msra.mxu0 %v283
    %308 = vmatprep.subr.mxu0 0.0
    %309 = vmatpush1.msra.mxu0 %v284
    %310 = vmatprep.subr.mxu0 0.0
    %311 = vmatpush1.msra.mxu0 %v285
    %312 = vmatprep.subr.mxu0 0.0
    %313 = vmatpush1.msra.mxu0 %v286
    %314 = vmatprep.subr.mxu0 0.0
    %315 = vmatpush1.msra.mxu0 %v287
    %316 = vmatprep.subr.mxu0 0.0
    %317 = vmatpush1.msra.mxu0 %v288
    %318 = vmatprep.subr.mxu0 0.0
    %319 = vmatpush1.msra.mxu0 %v289
    %320 = vmatprep.subr.mxu0 0.0
    %321 = vmatpush1.msra.mxu0 %v290
    %322 = vmatprep.subr.mxu0 0.0
    %323 = vmatpush1.msra.mxu0 %v291
    %324 = vmatprep.subr.mxu0 0.0
    %325 = vmatpush1.msra.mxu0 0.0
    %326 = vmatprep.subr.mxu0 0.0
    %327 = vmatpush1.msra.mxu0 0.0
    %328 = vmatprep.subr.mxu0 0.0
    %329 = vmatpush1.msra.mxu0 0.0
    %330 = vmatprep.subr.mxu0 0.0
    %331 = vmatpush1.msra.mxu0 0.0
    %332 = vmatprep.subr.mxu0 0.0
    %333 = vmatpush1.msra.mxu0 0.0
    %334 = vmatprep.subr.mxu0 0.0
    %335 = vmatpush1.msra.mxu0 0.0
    %336 = vmatprep.subr.mxu0 0.0
    %337 = vmatpush1.msra.mxu0 0.0
    %338 = vmatprep.subr.mxu0 0.0
    %339 = vmatpush1.msra.mxu0 0.0
    %340 = vmatprep.subr.mxu0 0.0
    %341 = vmatpush1.msra.mxu0 0.0
    %342 = vmatprep.subr.mxu0 0.0
    %343 = vmatpush1.msra.mxu0 0.0
    %344 = vmatprep.subr.mxu0 0.0
    %345 = vmatpush1.msra.mxu0 0.0
    %346 = vmatprep.subr.mxu0 0.0
    %347 = vmatpush1.msra.mxu0 0.0
    %348 = vmatprep.subr.mxu0 0.0
    %349 = vmatpush1.msra.mxu0 0.0
    %350 = vmatprep.subr.mxu0 0.0
    %351 = vmatpush1.msra.mxu0 0.0
    %352 = vmatprep.subr.mxu0 0.0
    %353 = vmatpush1.msra.mxu0 0.0
    %354 = vmatprep.subr.mxu0 0.0
    %355 = vmatpush1.msra.mxu0 0.0
    %356 = vmatprep.mubr.f32.mxu0 0.0
    %357 = vmatmul.mubr.f32.gmra.mrb[0].mxu0 %v274
    %v358 = vpop.f32.mrb[0].mxu0
    %v359 = vadd.f32 0.0, %v358
    %v360 = vpop.f32.mrb[0].mxu0
    %361 = vmatprep.mubr.f32.mxu0 0.0
    %362 = vmatmul.mubr.f32.gmra.mrb[0].mxu0 %v275
    %v363 = vpop.f32.mrb[0].mxu0
    %v364 = vadd.f32 0.0, %v363
    %v365 = vpop.f32.mrb[0].mxu0
    %366 = vdwg.mxu0
    %vm367 = vcmask 31744
    %v368 = vsel %vm367, %v359, -inf
    %v369 = vrot.slane %v368, 4
    %v370 = vmax.f32 %v368, %v369
    %v371 = vrot.slane %v370, 2
    %v372 = vmax.f32 %v370, %v371
    %v373 = vrot.slane %v372, 1
    %v374 = vmax.f32 %v372, %v373
    %v375 = vsel %vm367, %v364, -inf
    %v376 = vrot.slane %v375, 4
    %v377 = vmax.f32 %v375, %v376
    %v378 = vrot.slane %v377, 2
    %v379 = vmax.f32 %v377, %v378
    %v380 = vrot.slane %v379, 1
    %v381 = vmax.f32 %v379, %v380
    %v382 = vsub.f32 %v359, %v374
    %v383 = vsub.f32 %v364, %v381
    %v384 = vmul.f32 %v382, 1.442695
    %v385 = vpow.pop %v384
    %v386 = vmul.f32 %v383, 1.442695
    %v387 = vpow.pop %v386
    %v388 = vsel %vm367, %v385, 0.0
    %v389 = vrot.slane %v388, 4
    %v390 = vadd.f32 %v388, %v389
    %v391 = vrot.slane %v390, 2
    %v392 = vadd.f32 %v390, %v391
    %v393 = vrot.slane %v392, 1
    %v394 = vadd.f32 %v392, %v393
    %v395 = vsel %vm367, %v387, 0.0
    %v396 = vrot.slane %v395, 4
    %v397 = vadd.f32 %v395, %v396
    %v398 = vrot.slane %v397, 2
    %v399 = vadd.f32 %v397, %v398
    %v400 = vrot.slane %v399, 1
    %v401 = vadd.f32 %v399, %v400
    %v402 = vrcp.pop %v394
    %v403 = vrcp.pop %v401
    %v404 = vmul.f32 %v394, %v402
    %v405 = vmul.f32 %v401, %v403
    %v406 = vsub.f32 2.0, %v404
    %v407 = vsub.f32 2.0, %v405
    %v408 = vmul.f32 %v402, %v406
    %v409 = vmul.f32 %v403, %v407
    %v410 = vmul.f32 %v385, %v408
    %v411 = vmul.f32 %v387, %v409
    %v412 = vld [vmem:[%s7] sm:$0xf]
    %v414 = vsel %vm367, %v410, 0
    %v417 = vsel %vm367, %v411, 0
    %vm419 = vcmask 1043456
    %v421 = vsel %vm419, %v412, 0
    %423 = vmatprep.subr.mxu0 0.0
    %424 = vmatpush1.msra.mxu0 %v421
    %425 = vmatprep.subr.mxu0 0.0
    %426 = vmatpush1.msra.mxu0 0.0
    %427 = vmatprep.subr.mxu0 0.0
    %428 = vmatpush1.msra.mxu0 0.0
    %429 = vmatprep.subr.mxu0 0.0
    %430 = vmatpush1.msra.mxu0 0.0
    %431 = vmatprep.subr.mxu0 0.0
    %432 = vmatpush1.msra.mxu0 0.0
    %433 = vmatprep.subr.mxu0 0.0
    %434 = vmatpush1.msra.mxu0 0.0
    %435 = vmatprep.subr.mxu0 0.0
    %436 = vmatpush1.msra.mxu0 0.0
    %437 = vmatprep.subr.mxu0 0.0
    %438 = vmatpush1.msra.mxu0 0.0
    %439 = vmatprep.subr.mxu0 0.0
    %440 = vmatpush1.msra.mxu0 0.0
    %441 = vmatprep.subr.mxu0 0.0
    %442 = vmatpush1.msra.mxu0 0.0
    %443 = vmatprep.subr.mxu0 0.0
    %444 = vmatpush1.msra.mxu0 0.0
    %445 = vmatprep.subr.mxu0 0.0
    %446 = vmatpush1.msra.mxu0 0.0
    %447 = vmatprep.subr.mxu0 0.0
    %448 = vmatpush1.msra.mxu0 0.0
    %449 = vmatprep.subr.mxu0 0.0
    %450 = vmatpush1.msra.mxu0 0.0
    %451 = vmatprep.subr.mxu0 0.0
    %452 = vmatpush1.msra.mxu0 0.0
    %453 = vmatprep.subr.mxu0 0.0
    %454 = vmatpush1.msra.mxu0 0.0
    %455 = vmatprep.subr.mxu0 0.0
    %456 = vmatpush1.msra.mxu0 0.0
    %457 = vmatprep.subr.mxu0 0.0
    %458 = vmatpush1.msra.mxu0 0.0
    %459 = vmatprep.subr.mxu0 0.0
    %460 = vmatpush1.msra.mxu0 0.0
    %461 = vmatprep.subr.mxu0 0.0
    %462 = vmatpush1.msra.mxu0 0.0
    %463 = vmatprep.subr.mxu0 0.0
    %464 = vmatpush1.msra.mxu0 0.0
    %465 = vmatprep.subr.mxu0 0.0
    %466 = vmatpush1.msra.mxu0 0.0
    %467 = vmatprep.subr.mxu0 0.0
    %468 = vmatpush1.msra.mxu0 0.0
    %469 = vmatprep.subr.mxu0 0.0
    %470 = vmatpush1.msra.mxu0 0.0
    %471 = vmatprep.subr.mxu0 0.0
    %472 = vmatpush1.msra.mxu0 0.0
    %473 = vmatprep.subr.mxu0 0.0
    %474 = vmatpush1.msra.mxu0 0.0
    %475 = vmatprep.subr.mxu0 0.0
    %476 = vmatpush1.msra.mxu0 0.0
    %477 = vmatprep.subr.mxu0 0.0
    %478 = vmatpush1.msra.mxu0 0.0
    %479 = vmatprep.subr.mxu0 0.0
    %480 = vmatpush1.msra.mxu0 0.0
    %481 = vmatprep.subr.mxu0 0.0
    %482 = vmatpush1.msra.mxu0 0.0
    %483 = vmatprep.subr.mxu0 0.0
    %484 = vmatpush1.msra.mxu0 0.0
    %485 = vmatprep.subr.mxu0 0.0
    %486 = vmatpush1.msra.mxu0 0.0
    %487 = vmatprep.mubr.f32.mxu0 0.0
    %488 = vmatmul.mubr.f32.gmra.mrb[0].mxu0 %v414
    %v489 = vpop.f32.mrb[0].mxu0
    %v490 = vadd.f32 0.0, %v489
    %v491 = vpop.f32.mrb[0].mxu0
    %492 = vmatprep.mubr.f32.mxu0 0.0
    %493 = vmatmul.mubr.f32.gmra.mrb[0].mxu0 %v417
    %v494 = vpop.f32.mrb[0].mxu0
    %v495 = vadd.f32 0.0, %v494
    %v496 = vpop.f32.mrb[0].mxu0
    %497 = vdwg.mxu0
    %v498 = vmul.f32 %v490, %v155
    %v499 = vmul.f32 %v495, %v161
    %v500 = vrot.slane %v498, 4
    %v501 = vadd.f32 %v498, %v500
    %v502 = vrot.slane %v501, 2
    %v503 = vadd.f32 %v501, %v502
    %v504 = vrot.slane %v503, 1
    %v505 = vadd.f32 %v503, %v504
    %v506 = vrot.slane %v499, 4
    %v507 = vadd.f32 %v499, %v506
    %v508 = vrot.slane %v507, 2
    %v509 = vadd.f32 %v507, %v508
    %v510 = vrot.slane %v509, 1
    %v511 = vadd.f32 %v509, %v510
    %v512 = vld [vmem:[%s4] sm:$0xff]
    %v513 = vld [vmem:[%s4 + $0x8] sm:$0xff]
    %v514 = vld [vmem:[%s4 + $0x10] sm:$0xff]
    %v515 = vld [vmem:[%s4 + $0x18] sm:$0xff]
    %v516 = vld [vmem:[%s4 + $0x20] sm:$0xff]
    %v517 = vld [vmem:[%s4 + $0x28] sm:$0xff]
    %v518 = vld [vmem:[%s4 + $0x30] sm:$0xff]
    %v519 = vld [vmem:[%s4 + $0x38] sm:$0xff]
    %v520 = vld [vmem:[%s4 + $0x40] sm:$0xff]
    %v521 = vld [vmem:[%s4 + $0x48] sm:$0xff]
    %v522 = vld [vmem:[%s4 + $0x50] sm:$0xff]
    %v523 = vld [vmem:[%s4 + $0x58] sm:$0xff]
    %v524 = vld [vmem:[%s4 + $0x60] sm:$0xff]
    %v525 = vld [vmem:[%s4 + $0x68] sm:$0xff]
    %v526 = vld [vmem:[%s4 + $0x70] sm:$0xff]
    %v527 = vld [vmem:[%s4 + $0x78] sm:$0xff]
    %v528 = vld [vmem:[#allocation7] sm:$0x1]
    %v530 = vlaneseq
    %v531 = vshrl.u32 %v530, 7
    %v532 = vsub.s32 0, %v531
    %v533 = vrot.slane %v528, %v532
    %vm537 = vcmask 1041409
    %v538 = vsel %vm537, %v511, %v505
    %540 = vmatprep.subr.mxu0 0.0
    %541 = vmatpush1.msra.mxu0 %v512
    %542 = vmatprep.subr.mxu0 0.0
    %543 = vmatpush1.msra.mxu0 %v513
    %544 = vmatprep.subr.mxu0 0.0
    %545 = vmatpush1.msra.mxu0 %v514
    %546 = vmatprep.subr.mxu0 0.0
    %547 = vmatpush1.msra.mxu0 %v515
    %548 = vmatprep.subr.mxu0 0.0
    %549 = vmatpush1.msra.mxu0 %v516
    %550 = vmatprep.subr.mxu0 0.0
    %551 = vmatpush1.msra.mxu0 %v517
    %552 = vmatprep.subr.mxu0 0.0
    %553 = vmatpush1.msra.mxu0 %v518
    %554 = vmatprep.subr.mxu0 0.0
    %555 = vmatpush1.msra.mxu0 %v519
    %556 = vmatprep.subr.mxu0 0.0
    %557 = vmatpush1.msra.mxu0 %v520
    %558 = vmatprep.subr.mxu0 0.0
    %559 = vmatpush1.msra.mxu0 %v521
    %560 = vmatprep.subr.mxu0 0.0
    %561 = vmatpush1.msra.mxu0 %v522
    %562 = vmatprep.subr.mxu0 0.0
    %563 = vmatpush1.msra.mxu0 %v523
    %564 = vmatprep.subr.mxu0 0.0
    %565 = vmatpush1.msra.mxu0 %v524
    %566 = vmatprep.subr.mxu0 0.0
    %567 = vmatpush1.msra.mxu0 %v525
    %568 = vmatprep.subr.mxu0 0.0
    %569 = vmatpush1.msra.mxu0 %v526
    %570 = vmatprep.subr.mxu0 0.0
    %571 = vmatpush1.msra.mxu0 %v527
    %572 = vmatprep.subr.mxu0 0.0
    %573 = vmatpush1.msra.mxu0 0.0
    %574 = vmatprep.subr.mxu0 0.0
    %575 = vmatpush1.msra.mxu0 0.0
    %576 = vmatprep.subr.mxu0 0.0
    %577 = vmatpush1.msra.mxu0 0.0
    %578 = vmatprep.subr.mxu0 0.0
    %579 = vmatpush1.msra.mxu0 0.0
    %580 = vmatprep.subr.mxu0 0.0
    %581 = vmatpush1.msra.mxu0 0.0
    %582 = vmatprep.subr.mxu0 0.0
    %583 = vmatpush1.msra.mxu0 0.0
    %584 = vmatprep.subr.mxu0 0.0
    %585 = vmatpush1.msra.mxu0 0.0
    %586 = vmatprep.subr.mxu0 0.0
    %587 = vmatpush1.msra.mxu0 0.0
    %588 = vmatprep.subr.mxu0 0.0
    %589 = vmatpush1.msra.mxu0 0.0
    %590 = vmatprep.subr.mxu0 0.0
    %591 = vmatpush1.msra.mxu0 0.0
    %592 = vmatprep.subr.mxu0 0.0
    %593 = vmatpush1.msra.mxu0 0.0
    %594 = vmatprep.subr.mxu0 0.0
    %595 = vmatpush1.msra.mxu0 0.0
    %596 = vmatprep.subr.mxu0 0.0
    %597 = vmatpush1.msra.mxu0 0.0
    %598 = vmatprep.subr.mxu0 0.0
    %599 = vmatpush1.msra.mxu0 0.0
    %600 = vmatprep.subr.mxu0 0.0
    %601 = vmatpush1.msra.mxu0 0.0
    %602 = vmatprep.subr.mxu0 0.0
    %603 = vmatpush1.msra.mxu0 0.0
    %604 = vmatprep.mubr.f32.mxu0 0.0
    %605 = vmatmul.mubr.f32.gmra.mrb[0].mxu0 %v538
    %v606 = vpop.f32.mrb[0].mxu0
    %v607 = vadd.f32 %v533, %v606
    %v608 = vpop.f32.mrb[0].mxu0
    %609 = vdwg.mxu0
    %610 = vst [vmem:[#allocation8] sm:$0x3] %v607
    // Predicated region
    $region46: #{tpu_custom_call.1} parent=1 // pred_check
      _
    $region47: #{tpu_custom_call.1} parent=1 // pred_check_branch
      %612 = sbr.rel (0) target = $region49
    $region48: #{tpu_custom_call.1} parent=1 // pred_region
      %s614 = ssub.s32 32, 32
      %615 = vsyncadd [#allocation4], %s614
      %s617 = sshll.u32 [#allocation8], 4
      %s618 = int_to_ptr.vmem [resolvable:$true] %s617
      %620 = dma.vmem_to_hbm [thread:$0]  %s618, 32, %s8, [#allocation4]
    $region49: #{tpu_custom_call.1} parent=1 // pred_fallthru
      _
    // Predicated region
    $region50: #{tpu_custom_call.1} parent=1 // pred_check
      _
    $region51: #{tpu_custom_call.1} parent=1 // pred_check_branch
      %622 = sbr.rel (0) target = $region53
    $region52: #{tpu_custom_call.1} parent=1 // pred_region
      %623 = dma.done [#allocation4], 32
    $region53: #{tpu_custom_call.1} parent=1 // pred_fallthru
      _
    %624 = vsyncpa [#allocation3], 1
    %625 = vsyncpa [#allocation6], 1
    %626 = vsyncpa [#allocation4], 1

</llo_original>
